<compile_context>
chip_gen: v7x
topology: tpu7x:2x2x1
jax: 0.10.0
libtpu: 0.0.40
codegen_flags: <defaults>
</compile_context>

<pallas_src>
import functools
import math

import numpy as np
import jax
import jax.numpy as jnp
from jax.experimental import pallas as pl
from jax.experimental.pallas import tpu as pltpu

# ----------------------------- constants ---------------------------------------------
EMB = 48                            # mViT embedding dim
N_QUERY = 48
N_HEADS = 4
PATCH = 16
N_BINS = 100
FF_DIM = 1024
MIN_VAL, MAX_VAL = 0.001, 1.0

IRS = [(1, 16, 1, 1), (6, 24, 2, 2), (6, 32, 3, 2), (6, 64, 4, 2),
       (6, 96, 3, 1), (6, 160, 3, 2), (6, 320, 1, 1)]   # MobileNetV2 inverted residuals

_ENC_CFG = []                       # (expand, cin, cout, stride) per block (static)
_c = 32
for _t, _ch, _nb, _s in IRS:
    for _i in range(_nb):
        _ENC_CFG.append((_t, _c, _ch, _s if _i == 0 else 1))
        _c = _ch


def _round_up(x, m):
    return (x + m - 1) // m * m


# ----------------------------- tiled matmul (bf16 MXU, f32 acc) ----------------------
def _pick_tm(M):
    if M <= 1024:
        return _round_up(M, 8)
    for tm in range(512, 127, -8):          # largest divisor of M in [128, 512]
        if M % tm == 0:
            return tm
    return 256                              # fallback: pad M up


def _pick_tn(N):
    if N <= 640:
        return N                            # full-N block (no padding)
    if N % 512 == 0:
        return 512                          # v6e/v7x: fewer B re-DMAs
    if N % 256 == 0:
        return 256
    if N % 128 == 0:
        return 128
    return N


@functools.lru_cache(maxsize=None)
def _mm_call(Mp, K, N, tm, tn, act, slope, out_dtype, has_res):
    """C = act(A @ B + bias) [+ residual]; full-K block, no accumulator scratch."""

    def kernel(*refs):
        if has_res:
            a_ref, b_ref, bias_ref, res_ref, o_ref = refs
        else:
            a_ref, b_ref, bias_ref, o_ref = refs
            res_ref = None
        r = jnp.dot(a_ref[...], b_ref[...], preferred_element_type=jnp.float32)
        r = r + bias_ref[...]
        if act == "relu":
            r = jnp.maximum(r, 0.0)
        elif act == "relu6":
            r = jnp.clip(r, 0.0, 6.0)
        elif act == "leaky":
            r = jnp.where(r >= 0.0, r, slope * r)
        if has_res:
            r = r + res_ref[...].astype(jnp.float32)
        o_ref[...] = r.astype(o_ref.dtype)

    in_specs = [pl.BlockSpec((tm, K), lambda i, j: (i, 0)),
                pl.BlockSpec((K, tn), lambda i, j: (0, j)),
                pl.BlockSpec((1, tn), lambda i, j: (0, j))]
    if has_res:
        in_specs.append(pl.BlockSpec((tm, tn), lambda i, j: (i, j)))

    f = pl.pallas_call(
        kernel,
        out_shape=jax.ShapeDtypeStruct((Mp, N), out_dtype),
        grid_spec=pltpu.PrefetchScalarGridSpec(
            num_scalar_prefetch=0,
            grid=(Mp // tm, N // tn),
            in_specs=in_specs,
            out_specs=pl.BlockSpec((tm, tn), lambda i, j: (i, j))),
        compiler_params=pltpu.CompilerParams(
            dimension_semantics=("parallel", "parallel")),
    )
    return jax.jit(f)


def matmul(a, b, bias=None, act="none", slope=0.0, out_dtype=jnp.bfloat16, residual=None):
    M, K = a.shape
    K2, N = b.shape
    assert K == K2
    if bias is None:
        bias = jnp.zeros((N,), jnp.float32)
    tm, tn = _pick_tm(M), _pick_tn(N)
    Mp = _round_up(M, tm)
    a_p = a.astype(jnp.bfloat16)
    if Mp != M:
        a_p = jnp.pad(a_p, ((0, Mp - M), (0, 0)))
    args = [a_p, b.astype(jnp.bfloat16), bias.astype(jnp.float32).reshape(1, N)]
    if residual is not None:
        r_p = residual.astype(jnp.bfloat16)
        if Mp != M:
            r_p = jnp.pad(r_p, ((0, Mp - M), (0, 0)))
        args.append(r_p)
    out = _mm_call(Mp, K, N, tm, tn, act, float(slope), out_dtype,
                   residual is not None)(*args)
    return out if Mp == M else out[:M]


# ----------------------------- direct 3x3 stride-1 conv kernel -----------------------
def _pick_conv_chunk(h, wp, cap=2048):
    cands = [t for t in range(1, h + 1) if h % t == 0 and t * wp <= cap]
    return max(cands) if cands else 1


@functools.lru_cache(maxsize=None)
def _conv3_call(n, h, w, cins, cout, act, slope, chunk, wp, Lp):
    """3x3 / stride 1 / pad 1 conv on flattened padded NHWC image(s).

    Supports a K-split over multiple input tensors (fused channel concat).  Output is
    produced in padded-width layout (h, wp, cout) flattened; caller slices garbage
    columns off.  9 shifted-window matmuls per input accumulate in f32 in VMEM.
    """
    M = chunk * wp                       # wp is a multiple of 8 -> M multiple of 8
    grid_r = h // chunk
    ninp = len(cins)

    def kernel(*refs):
        x_refs = refs[:ninp]
        w_refs = refs[ninp:2 * ninp]
        b_ref = refs[2 * ninp]
        o_ref = refs[2 * ninp + 1]
        r0 = pl.program_id(1) * M
        acc = None
        for xi in range(ninp):
            xr, wr = x_refs[xi], w_refs[xi]
            for dy in range(3):
                base = pl.multiple_of(r0 + dy * wp, 8)
                for dx in range(3):
                    a = xr[pl.ds(base + dx, M), :]
                    d = jnp.dot(a, wr[dy * 3 + dx], preferred_element_type=jnp.float32)
                    acc = d if acc is None else acc + d
        acc = acc + b_ref[...]
        if act == "leaky":
            acc = jnp.where(acc >= 0.0, acc, slope * acc)
        elif act == "relu":
            acc = jnp.maximum(acc, 0.0)
        elif act == "relu6":
            acc = jnp.clip(acc, 0.0, 6.0)
        o_ref[...] = acc.astype(o_ref.dtype)

    in_specs = ([pl.BlockSpec((None, Lp, cins[i]), lambda b, r: (b, 0, 0))
                 for i in range(ninp)]
                + [pl.BlockSpec((9, cins[i], cout), lambda b, r: (0, 0, 0))
                   for i in range(ninp)]
                + [pl.BlockSpec((1, cout), lambda b, r: (0, 0))])

    f = pl.pallas_call(
        kernel,
        out_shape=jax.ShapeDtypeStruct((n, h * wp, cout), jnp.bfloat16),
        grid_spec=pltpu.PrefetchScalarGridSpec(
            num_scalar_prefetch=0,
            grid=(n, grid_r),
            in_specs=in_specs,
            out_specs=pl.BlockSpec((None, M, cout), lambda b, r: (b, r, 0))),
        compiler_params=pltpu.CompilerParams(
            dimension_semantics=("parallel", "parallel"),
            vmem_limit_bytes=32 * 1024 * 1024),
    )
    return jax.jit(f)


def conv3x3_s1(xs, ws, b, act="none", slope=0.0):
    """3x3/s1/p1 conv; `xs`/`ws` may be tuples -> fused channel-concat (K-split)."""
    if not isinstance(xs, (tuple, list)):
        xs, ws = (xs,), (ws,)
    n, h, wd = xs[0].shape[:3]
    cins = tuple(int(x.shape[-1]) for x in xs)
    cout = int(ws[0].shape[-1])
    hp = h + 2
    wp = _round_up(wd + 2, 8)            # aligned flattened-width stride
    Lp = hp * wp + 8                     # slack so shifted tap reads stay in-bounds
    flats = []
    for x in xs:
        xpad = jnp.pad(x.astype(jnp.bfloat16),
                       ((0, 0), (1, 1), (1, wp - wd - 1), (0, 0)))
        xf = xpad.reshape(n, hp * wp, -1)
        xf = jnp.pad(xf, ((0, 0), (0, Lp - hp * wp), (0, 0)))
        flats.append(xf)
    chunk = _pick_conv_chunk(h, wp)
    out = _conv3_call(n, h, wd, cins, cout, act, float(slope), chunk, wp, Lp)(
        *flats, *[w.astype(jnp.bfloat16) for w in ws],
        b.astype(jnp.float32).reshape(1, cout))
    return out.reshape(n, h, wp, cout)[:, :, :wd, :]


# ----------------------------- depthwise 3x3 kernel (stride 1 & 2) -------------------
def _pick_dw_chunk(ho, wo, c, budget=512 * 1024):
    best = 1
    for t in range(1, ho + 1):
        if ho % t == 0 and t * wo * c * 4 <= budget:
            best = t
    return best


@functools.lru_cache(maxsize=None)
def _dw_call(n, ho, wo, c, stride, act, chunk):
    grid_r = ho // chunk

    if stride == 1:
        def kernel(x_ref, w_ref, b_ref, o_ref):
            r0 = pl.program_id(1) * chunk
            wk = w_ref[...]
            bias = b_ref[...]
            acc = jnp.zeros((chunk, wo, c), jnp.float32)
            for dy in range(3):
                for dx in range(3):
                    tap = x_ref[pl.ds(r0 + dy, chunk), pl.ds(dx, wo), :].astype(jnp.float32)
                    acc = acc + tap * wk[dy:dy + 1, dx:dx + 1, :]
            acc = acc + bias[None, :, :]
            if act == "relu6":
                acc = jnp.clip(acc, 0.0, 6.0)
            o_ref[...] = acc.astype(o_ref.dtype)

        in_specs = [pl.BlockSpec((None, ho + 2, wo + 2, c), lambda i, r: (i, 0, 0, 0)),
                    pl.BlockSpec((3, 3, c), lambda i, r: (0, 0, 0)),
                    pl.BlockSpec((1, c), lambda i, r: (0, 0))]
    else:
        def kernel(p00, p01, p10, p11, w_ref, b_ref, o_ref):
            r0 = pl.program_id(1) * chunk
            planes = ((p00, p01), (p10, p11))
            wk = w_ref[...]
            bias = b_ref[...]
            acc = jnp.zeros((chunk, wo, c), jnp.float32)
            for dy in range(3):
                for dx in range(3):
                    pr = planes[dy % 2][dx % 2]
                    tap = pr[pl.ds(r0 + dy // 2, chunk),
                             pl.ds(dx // 2, wo), :].astype(jnp.float32)
                    acc = acc + tap * wk[dy:dy + 1, dx:dx + 1, :]
            acc = acc + bias[None, :, :]
            if act == "relu6":
                acc = jnp.clip(acc, 0.0, 6.0)
            o_ref[...] = acc.astype(o_ref.dtype)

        plane_spec = pl.BlockSpec((None, ho + 1, wo + 1, c), lambda i, r: (i, 0, 0, 0))
        in_specs = [plane_spec] * 4 + [pl.BlockSpec((3, 3, c), lambda i, r: (0, 0, 0)),
                                       pl.BlockSpec((1, c), lambda i, r: (0, 0))]

    f = pl.pallas_call(
        kernel,
        out_shape=jax.ShapeDtypeStruct((n, ho, wo, c), jnp.bfloat16),
        grid=(n, grid_r),
        in_specs=in_specs,
        out_specs=pl.BlockSpec((None, chunk, wo, c), lambda i, r: (i, r, 0, 0)),
        compiler_params=pltpu.CompilerParams(
            dimension_semantics=("parallel", "parallel")),
    )
    return jax.jit(f)


def depthwise3x3(x, w, b, stride=1, act="relu6"):
    x = x.astype(jnp.bfloat16)
    n, h, wd, c = x.shape
    xp = jnp.pad(x, ((0, 0), (1, 1), (1, 1), (0, 0)))
    if stride == 1:
        chunk = _pick_dw_chunk(h, wd, c)
        return _dw_call(n, h, wd, c, 1, act, chunk)(xp, w, b.reshape(1, c))
    ho, wo = h // 2, wd // 2
    # TODO(synk): parity-plane decimation stays in XLA glue (strided slices); emitting the
    #             planes directly from the preceding 1x1's out index_map would save a pass.
    planes = [xp[:, py::2, px::2, :][:, :ho + 1, :wo + 1, :]
              for py in (0, 1) for px in (0, 1)]
    chunk = _pick_dw_chunk(ho, wo, c)
    return _dw_call(n, ho, wo, c, 2, act, chunk)(planes[0], planes[1], planes[2],
                                                 planes[3], w, b.reshape(1, c))


# ----------------------------- fused mViT transformer stack --------------------------
@functools.lru_cache(maxsize=None)
def _tstack_call(nb, nlayers, s, e, heads, ff):
    dh = e // heads
    scale = 1.0 / math.sqrt(dh)

    def kernel(x_ref, inw_ref, inb_ref, outw_ref, outb_ref, g1_ref, b1_ref,
               f1w_ref, f1b_ref, f2w_ref, f2b_ref, g2_ref, b2_ref, o_ref, tgt_ref):
        l = pl.program_id(1)

        @pl.when(l == 0)
        def _():
            tgt_ref[...] = x_ref[...].astype(jnp.float32)

        x = tgt_ref[...]                                                    # (s, e) f32
        xb = x.astype(jnp.bfloat16)
        qkv = jnp.dot(xb, inw_ref[...],
                      preferred_element_type=jnp.float32) + inb_ref[...]    # (s, 3e)
        attn = jnp.zeros((s, e), jnp.float32)
        for hh in range(heads):
            q = qkv[:, hh * dh:(hh + 1) * dh]
            k = qkv[:, e + hh * dh:e + (hh + 1) * dh]
            v = qkv[:, 2 * e + hh * dh:2 * e + (hh + 1) * dh]
            sc = jax.lax.dot_general(q, k, (((1,), (1,)), ((), ())),
                                     preferred_element_type=jnp.float32) * scale
            m = jnp.max(sc, axis=-1, keepdims=True)
            pr = jnp.exp(sc - m)
            pr = pr / jnp.sum(pr, axis=-1, keepdims=True)
            ao = jnp.dot(pr, v, preferred_element_type=jnp.float32)         # (s, dh)
            attn = attn + jnp.dot(ao.astype(jnp.bfloat16),
                                  outw_ref[hh * dh:(hh + 1) * dh, :],
                                  preferred_element_type=jnp.float32)
        x1 = x + attn + outb_ref[...]
        mu = jnp.mean(x1, axis=-1, keepdims=True)
        var = jnp.mean(jnp.square(x1 - mu), axis=-1, keepdims=True)
        x1 = (x1 - mu) * jax.lax.rsqrt(var + 1e-5) * g1_ref[...] + b1_ref[...]
        h1 = jnp.maximum(jnp.dot(x1.astype(jnp.bfloat16), f1w_ref[...],
                                 preferred_element_type=jnp.float32) + f1b_ref[...], 0.0)
        h2 = jnp.dot(h1.astype(jnp.bfloat16), f2w_ref[...],
                     preferred_element_type=jnp.float32) + f2b_ref[...]
        x2 = x1 + h2
        mu = jnp.mean(x2, axis=-1, keepdims=True)
        var = jnp.mean(jnp.square(x2 - mu), axis=-1, keepdims=True)
        y = (x2 - mu) * jax.lax.rsqrt(var + 1e-5) * g2_ref[...] + b2_ref[...]
        tgt_ref[...] = y

        @pl.when(l == nlayers - 1)
        def _():
            o_ref[...] = y.astype(o_ref.dtype)

    def wspec(d1, d2):
        return pl.BlockSpec((None, d1, d2), lambda b, l: (l, 0, 0))

    f = pl.pallas_call(
        kernel,
        out_shape=jax.ShapeDtypeStruct((nb, s, e), jnp.bfloat16),
        grid_spec=pltpu.PrefetchScalarGridSpec(
            num_scalar_prefetch=0,
            grid=(nb, nlayers),
            in_specs=[pl.BlockSpec((None, s, e), lambda b, l: (b, 0, 0)),
                      wspec(e, 3 * e), wspec(1, 3 * e),
                      wspec(e, e), wspec(1, e),
                      wspec(1, e), wspec(1, e),
                      wspec(e, ff), wspec(1, ff),
                      wspec(ff, e), wspec(1, e),
                      wspec(1, e), wspec(1, e)],
            out_specs=pl.BlockSpec((None, s, e), lambda b, l: (b, 0, 0)),
            scratch_shapes=[pltpu.VMEM((s, e), jnp.float32)]),
        compiler_params=pltpu.CompilerParams(
            dimension_semantics=("parallel", "arbitrary")),
    )
    return jax.jit(f)


# ------------- fused head: PixelWiseDotProduct + conv_out + softmax + expectation ----
@functools.lru_cache(maxsize=None)
def _head_call(n, hw_p, tm):
    rows = tm // 128                      # tm multiple of 1024 -> rows multiple of 8

    def kernel(x_ref, q_ref, w_ref, b_ref, c_ref, o_ref):
        ram = jax.lax.dot_general(x_ref[...], q_ref[...], (((1,), (1,)), ((), ())),
                                  preferred_element_type=jnp.float32)        # (tm, NQ)
        logits = jnp.dot(ram.astype(jnp.bfloat16), w_ref[...],
                         preferred_element_type=jnp.float32) + b_ref[...]    # (tm, NB)
        m = jnp.max(logits, axis=-1, keepdims=True)
        ex = jnp.exp(logits - m)
        prob = ex / jnp.sum(ex, axis=-1, keepdims=True)
        c = c_ref[...]                                                       # (1, NB)
        # lane-dense store: each 128-pixel group becomes one (1,128) row via c @ P^T
        for r in range(rows):
            row = jax.lax.dot_general(c, prob[r * 128:(r + 1) * 128, :],
                                      (((1,), (1,)), ((), ())),
                                      preferred_element_type=jnp.float32)    # (1, 128)
            o_ref[pl.ds(r, 1), :] = row

    f = pl.pallas_call(
        kernel,
        out_shape=jax.ShapeDtypeStruct((n, hw_p // 128, 128), jnp.float32),
        grid_spec=pltpu.PrefetchScalarGridSpec(
            num_scalar_prefetch=0,
            grid=(n, hw_p // tm),
            in_specs=[pl.BlockSpec((None, tm, EMB), lambda b, i: (b, i, 0)),
                      pl.BlockSpec((None, N_QUERY, EMB), lambda b, i: (b, 0, 0)),
                      pl.BlockSpec((EMB, N_BINS), lambda b, i: (0, 0)),
                      pl.BlockSpec((1, N_BINS), lambda b, i: (0, 0)),
                      pl.BlockSpec((None, 1, N_BINS), lambda b, i: (b, 0, 0))],
            out_specs=pl.BlockSpec((None, tm // 128, 128), lambda b, i: (b, i, 0))),
        compiler_params=pltpu.CompilerParams(
            dimension_semantics=("parallel", "parallel")),
    )
    return jax.jit(f)


# ----------------------------- conv wrappers (JAX glue, Pallas hot path) --------------
def conv1x1(x, w, b, act="none", slope=0.0, padding=0, residual=None):
    n, h, wd, c = x.shape
    if padding:
        x = jnp.pad(x, ((0, 0), (padding, padding), (padding, padding), (0, 0)))
        h += 2 * padding
        wd += 2 * padding
    res_flat = None if residual is None else residual.reshape(n * h * wd, -1)
    out = matmul(x.reshape(n * h * wd, c), w, b, act=act, slope=slope, residual=res_flat)
    return out.reshape(n, h, wd, -1)


def conv2d_s2_3x3(x, w, b, act="none"):
    """3x3 stride-2 pad-1 conv (encoder stem, cin=3) via small im2col + matmul."""
    n, h, wd, c = x.shape
    xp = jnp.pad(x, ((0, 0), (1, 1), (1, 1), (0, 0)))
    ho, wo = h // 2, wd // 2
    cols = [xp[:, dy:dy + 2 * ho:2, dx:dx + 2 * wo:2, :]
            for dy in range(3) for dx in range(3)]
    patches = jnp.concatenate(cols, axis=-1).reshape(n * ho * wo, 9 * c)
    return matmul(patches, w, b, act=act).reshape(n, ho, wo, -1)


def conv2d_patch(x, w, b, ksize):
    """kxk conv with stride k, pad 0 (mViT patch embedding) as reshape + matmul."""
    n, h, wd, c = x.shape
    ho, wo = h // ksize, wd // ksize
    patches = x.reshape(n, ho, ksize, wo, ksize, c).transpose(0, 1, 3, 2, 4, 5)
    patches = patches.reshape(n * ho * wo, ksize * ksize * c)
    return matmul(patches, w, b).reshape(n, ho, wo, -1)


@functools.lru_cache(maxsize=None)
def _interp_matrix(o, i):
    """align_corners=True bilinear interpolation matrix (o, i) as a constant."""
    m = np.zeros((o, i), np.float32)
    if o == 1:
        m[0, 0] = 1.0
        return jnp.asarray(m)
    pos = np.arange(o, dtype=np.float64) * ((i - 1) / (o - 1))
    lo = np.clip(np.floor(pos).astype(np.int64), 0, i - 1)
    hi = np.minimum(lo + 1, i - 1)
    frac = (pos - lo).astype(np.float32)
    m[np.arange(o), lo] += 1.0 - frac
    m[np.arange(o), hi] += frac
    return jnp.asarray(m)


def resize_bilinear_ac(x, oh, ow):
    """Bilinear (align_corners=True) resize via static interp matrices (MXU, no gathers)."""
    n, h, w, c = x.shape
    if (h, w) == (oh, ow):
        return x.astype(jnp.bfloat16)
    wy = _interp_matrix(oh, h)                   # (oh, h)
    wx = _interp_matrix(ow, w)                   # (ow, w)
    xf = x.astype(jnp.float32)
    y = jnp.einsum('Oh,nhwc->nOwc', wy, xf)
    y = jnp.einsum('Pw,nOwc->nOPc', wx, y)
    return y.astype(jnp.bfloat16)


# ----------------------------- parameter init ----------------------------------------
class KeyGen:
    def __init__(self, seed):
        self.key = jax.random.PRNGKey(seed)

    def __call__(self):
        self.key, sub = jax.random.split(self.key)
        return sub


def w_init(kg, shape, fan_in, dtype=jnp.bfloat16):
    return (jax.random.normal(kg(), shape, jnp.float32) / math.sqrt(fan_in)).astype(dtype)


def b_init(kg, shape):
    return 0.01 * jax.random.normal(kg(), shape, jnp.float32)


def init_encoder(kg):
    p = {"conv0_w": w_init(kg, (27, 32), 27), "conv0_b": b_init(kg, (32,))}
    blocks = []
    for t, cin, cout, _ in _ENC_CFG:
        hid = cin * t
        bp = {}
        if t != 1:
            bp["pw_w"] = w_init(kg, (cin, hid), cin)
            bp["pw_b"] = b_init(kg, (hid,))
        bp["dw_w"] = w_init(kg, (3, 3, hid), 9, jnp.float32)
        bp["dw_b"] = b_init(kg, (hid,))
        bp["pj_w"] = w_init(kg, (hid, cout), hid)
        bp["pj_b"] = b_init(kg, (cout,))
        blocks.append(bp)
    p["blocks"] = blocks
    p["conv_last_w"] = w_init(kg, (320, 1280), 320)
    p["conv_last_b"] = b_init(kg, (1280,))
    return p


def init_decoder(kg, num_features=1280, decoder_width=0.6):
    f = int(num_features * decoder_width)   # 768
    p = {"conv2_w": w_init(kg, (num_features, f), num_features),
         "conv2_b": b_init(kg, (f,))}

    def up(si, of):
        return {"wA": w_init(kg, (9, si, of), 9 * si), "bA": b_init(kg, (of,)),
                "wB": w_init(kg, (9, of, of), 9 * of), "bB": b_init(kg, (of,))}

    p["up0"] = up(f + 320, f // 2)
    p["up1"] = up(f // 2 + 160, f // 2)
    p["up2"] = up(f // 2 + 64, f // 4)
    p["up3"] = up(f // 4 + 32, f // 8)
    p["up4"] = up(f // 8 + 24, f // 8)
    p["up5"] = up(f // 8 + 16, f // 16)
    # Decoder.conv3 exists in __init__ but is unused in Decoder.forward — skipped.
    return p


def init_mvit(kg):
    p = {"embed_w": w_init(kg, (PATCH * PATCH * EMB, EMB), PATCH * PATCH * EMB),
         "embed_b": b_init(kg, (EMB,)),
         "pos": jax.random.uniform(kg(), (500, EMB), jnp.float32)}
    layers = []
    for _ in range(4):
        layers.append({
            "in_w": w_init(kg, (EMB, 3 * EMB), EMB), "in_b": b_init(kg, (3 * EMB,)),
            "out_w": w_init(kg, (EMB, EMB), EMB), "out_b": b_init(kg, (EMB,)),
            "ln1_g": jnp.ones((EMB,), jnp.float32), "ln1_b": jnp.zeros((EMB,), jnp.float32),
            "ff1_w": w_init(kg, (EMB, FF_DIM), EMB), "ff1_b": b_init(kg, (FF_DIM,)),
            "ff2_w": w_init(kg, (FF_DIM, EMB), FF_DIM), "ff2_b": b_init(kg, (EMB,)),
            "ln2_g": jnp.ones((EMB,), jnp.float32), "ln2_b": jnp.zeros((EMB,), jnp.float32)})
    p["layers"] = layers
    p["conv3_w"] = w_init(kg, (9, EMB, EMB), 9 * EMB)
    p["conv3_b"] = b_init(kg, (EMB,))
    p["r1_w"] = w_init(kg, (EMB, 256), EMB);    p["r1_b"] = b_init(kg, (256,))
    p["r2_w"] = w_init(kg, (256, 256), 256);    p["r2_b"] = b_init(kg, (256,))
    p["r3_w"] = w_init(kg, (256, N_BINS), 256); p["r3_b"] = b_init(kg, (N_BINS,))
    return p


def init_udepth(seed=0):
    kg = KeyGen(seed)
    return {"encoder": init_encoder(kg),
            "decoder": init_decoder(kg),
            "mvit": init_mvit(kg),
            "conv_out_w": w_init(kg, (EMB, N_BINS), EMB),
            "conv_out_b": b_init(kg, (N_BINS,))}


# ----------------------------- model forward ------------------------------------------
def encoder_forward(p, x):
    feats = [x]
    y = conv2d_s2_3x3(x, p["conv0_w"], p["conv0_b"], act="relu6")
    feats.append(y)
    for (t, cin, cout, stride), bp in zip(_ENC_CFG, p["blocks"]):
        out = y
        if t != 1:
            out = conv1x1(out, bp["pw_w"], bp["pw_b"], act="relu6")
        out = depthwise3x3(out, bp["dw_w"], bp["dw_b"], stride=stride, act="relu6")
        if stride == 1 and cin == cout:
            out = conv1x1(out, bp["pj_w"], bp["pj_b"], act="none", residual=y)
        else:
            out = conv1x1(out, bp["pj_w"], bp["pj_b"], act="none")
        y = out
        feats.append(y)
    feats.append(conv1x1(y, p["conv_last_w"], p["conv_last_b"], act="relu6"))
    return feats


def upsample_block(p, x, skip):
    up = resize_bilinear_ac(x, skip.shape[1], skip.shape[2])
    c_up = up.shape[-1]
    wa = p["wA"]
    # concat([up, skip]) folded into convA as two K-segments (no HBM concat).
    y = conv3x3_s1((up, skip), (wa[:, :c_up, :], wa[:, c_up:, :]), p["bA"],
                   act="leaky", slope=0.2)
    # TODO(synk): convB could consume convA's padded-width layout directly (kill slice/re-pad).
    y = conv3x3_s1(y, p["wB"], p["bB"], act="leaky", slope=0.2)
    return y


def decoder_forward(p, feats):
    xb0, xb1, xb2, xb3, xb4, xb5, xb6 = (feats[2], feats[4], feats[6], feats[9],
                                         feats[15], feats[18], feats[19])
    x_d0 = conv1x1(xb6, p["conv2_w"], p["conv2_b"], act="none", padding=1)
    x_d1 = upsample_block(p["up0"], x_d0, xb5)
    x_d2 = upsample_block(p["up1"], x_d1, xb4)
    x_d3 = upsample_block(p["up2"], x_d2, xb3)
    x_d4 = upsample_block(p["up3"], x_d3, xb2)
    x_d5 = upsample_block(p["up4"], x_d4, xb1)
    x_d6 = upsample_block(p["up5"], x_d5, xb0)
    return x_d6


def mvit_forward(p, x):
    n, h, w, _ = x.shape
    e = conv2d_patch(x, p["embed_w"], p["embed_b"], PATCH)          # (n, 7, 7, EMB)
    S = e.shape[1] * e.shape[2]
    emb = e.reshape(n, S, EMB).astype(jnp.float32) + p["pos"][:S][None, :, :]
    tgt0 = emb.astype(jnp.bfloat16)
    L = len(p["layers"])
    stk = {k: jnp.stack([lp[k] for lp in p["layers"]]) for k in p["layers"][0]}
    tgt = _tstack_call(n, L, S, EMB, N_HEADS, FF_DIM)(
        tgt0,
        stk["in_w"], stk["in_b"].reshape(L, 1, -1),
        stk["out_w"], stk["out_b"].reshape(L, 1, -1),
        stk["ln1_g"].reshape(L, 1, -1), stk["ln1_b"].reshape(L, 1, -1),
        stk["ff1_w"], stk["ff1_b"].reshape(L, 1, -1),
        stk["ff2_w"], stk["ff2_b"].reshape(L, 1, -1),
        stk["ln2_g"].reshape(L, 1, -1), stk["ln2_b"].reshape(L, 1, -1))
    head = tgt[:, 0, :].astype(jnp.float32)          # (n, E)
    queries = tgt[:, 1:N_QUERY + 1, :]               # (n, 48, E)
    xc = conv3x3_s1(x, p["conv3_w"], p["conv3_b"], act="none")      # (n, h, w, E)
    # tiny regressor (3 matmuls on a (n, 48) vector) left to XLA — not worth launches
    y = head @ p["r1_w"].astype(jnp.float32) + p["r1_b"]
    y = jnp.where(y >= 0.0, y, 0.01 * y)
    y = y @ p["r2_w"].astype(jnp.float32) + p["r2_b"]
    y = jnp.where(y >= 0.0, y, 0.01 * y)
    y = y @ p["r3_w"].astype(jnp.float32) + p["r3_b"]
    y = jnp.maximum(y, 0.0) + 0.1                    # norm == 'linear'
    bin_widths_normed = y / jnp.sum(y, axis=1, keepdims=True)
    return bin_widths_normed, xc, queries


def udepth_forward(params, x_nchw):
    x = jnp.transpose(x_nchw, (0, 2, 3, 1)).astype(jnp.bfloat16)     # NCHW -> NHWC
    feats = encoder_forward(params["encoder"], x)
    unet_out = decoder_forward(params["decoder"], feats)             # (N, H/2, W/2, 48)
    bin_widths_normed, xc, queries = mvit_forward(params["mvit"], unet_out)
    n, h, w, _ = xc.shape
    # bin edges / centers (tiny — plain JAX)
    bin_widths = (MAX_VAL - MIN_VAL) * bin_widths_normed
    bin_widths = jnp.concatenate([jnp.full((n, 1), MIN_VAL, jnp.float32), bin_widths], axis=1)
    bin_edges = jnp.cumsum(bin_widths, axis=1)
    centers = 0.5 * (bin_edges[:, :-1] + bin_edges[:, 1:])           # (N, 100)
    # fused PixelWiseDotProduct + conv_out 1x1 + channel softmax + expectation kernel
    assert N_QUERY == EMB, "fused head relies on n_query_channels == embedding_dim"
    hw = h * w
    tm = 1024                                         # rows=8 -> (8,128)-aligned out blocks
    hw_p = _round_up(hw, tm)
    xc_flat = xc.reshape(n, hw, EMB)
    if hw_p != hw:
        xc_flat = jnp.pad(xc_flat, ((0, 0), (0, hw_p - hw), (0, 0)))
    pred = _head_call(n, hw_p, tm)(
        xc_flat, queries, params["conv_out_w"],
        params["conv_out_b"].astype(jnp.float32).reshape(1, N_BINS),
        centers.reshape(n, 1, N_BINS))                # (n, hw_p/128, 128) lane-dense
    pred = pred.reshape(n, hw_p)[:, :hw].reshape(n, h, w, 1)
    pred_nchw = jnp.transpose(pred, (0, 3, 1, 2))                    # back to NCHW
    return bin_edges, pred_nchw


# ----------------------------- main ----------------------------------------------------
if __name__ == "__main__":
    params = init_udepth(0)
    # 224x224 is the smallest square input: mViT needs >= 49 patches (queries tgt[1:49])
    # from the half-resolution decoder output with a 16x16 patch embedding.
    x = jax.random.normal(jax.random.PRNGKey(0), (1, 3, 224, 224), jnp.float32)
    fwd = jax.jit(udepth_forward)
    bin_edges, pred = fwd(params, x)
    jax.block_until_ready((bin_edges, pred))
    assert bin_edges.shape == (1, N_BINS + 1)
    assert pred.shape == (1, 1, 112, 112)
    assert bool(jnp.isfinite(bin_edges).all()) and bool(jnp.isfinite(pred).all())
    print("KERNEL_OK")
</pallas_src>

<mosaic_0001>
module attributes {stable_mosaic.version = 11 : i64} {
  func.func @kernel(%arg0: i32, %arg1: i32, %arg2: memref<448x27xbf16, #tpu.memory_space<vmem>>, %arg3: memref<27x32xbf16, #tpu.memory_space<vmem>>, %arg4: memref<1x32xf32, #tpu.memory_space<vmem>>, %arg5: memref<448x32xbf16, #tpu.memory_space<vmem>>) attributes {dimension_semantics = [#tpu.dimension_semantics<parallel>, #tpu.dimension_semantics<parallel>], iteration_bounds = array<i64: 28, 1>, scalar_prefetch = 0 : i64, scratch_operands = 0 : i64, tpu.core_type = #tpu.core_type<tc>, window_params = [{transform_indices = @transform_0, window_bounds = array<i64: 448, 27>}, {transform_indices = @transform_1, window_bounds = array<i64: 27, 32>}, {transform_indices = @transform_2, window_bounds = array<i64: 1, 32>}, {transform_indices = @transform_3, window_bounds = array<i64: 448, 32>}]} {
    %c0 = arith.constant 0 : index
    %c0_0 = arith.constant 0 : index
    %0 = vector.load %arg2[%c0, %c0_0] : memref<448x27xbf16, #tpu.memory_space<vmem>>, vector<448x27xbf16>
    %c0_1 = arith.constant 0 : index
    %c0_2 = arith.constant 0 : index
    %1 = vector.load %arg3[%c0_1, %c0_2] : memref<27x32xbf16, #tpu.memory_space<vmem>>, vector<27x32xbf16>
    %cst = arith.constant dense<0.000000e+00> : vector<448x32xf32>
    %2 = tpu.matmul %0, %1, %cst {dimension_numbers = #tpu.dot_dimension_numbers<[1], [0], [0], [1], [0, 0, 1, 1], [], []>} : vector<448x27xbf16>, vector<27x32xbf16>, vector<448x32xf32> -> vector<448x32xf32>
    %c0_3 = arith.constant 0 : index
    %c0_4 = arith.constant 0 : index
    %3 = vector.load %arg4[%c0_3, %c0_4] : memref<1x32xf32, #tpu.memory_space<vmem>>, vector<1x32xf32>
    %4 = vector.broadcast %3 : vector<1x32xf32> to vector<448x32xf32>
    %5 = arith.addf %2, %4 : vector<448x32xf32>
    %cst_5 = arith.constant 0.000000e+00 : f32
    %cst_6 = arith.constant 6.000000e+00 : f32
    %6 = vector.broadcast %cst_5 : f32 to vector<448x32xf32>
    %7 = arith.maximumf %6, %5 : vector<448x32xf32>
    %8 = vector.broadcast %cst_6 : f32 to vector<448x32xf32>
    %9 = arith.minimumf %8, %7 : vector<448x32xf32>
    %10 = arith.truncf %9 : vector<448x32xf32> to vector<448x32xbf16>
    %c0_7 = arith.constant 0 : index
    %c0_8 = arith.constant 0 : index
    %11 = vector.load %arg5[%c0_7, %c0_8] : memref<448x32xbf16, #tpu.memory_space<vmem>>, vector<448x32xbf16>
    tpu.vector_store %arg5[%c0_7, %c0_8], %10 {strides = array<i32>} : memref<448x32xbf16, #tpu.memory_space<vmem>>, vector<448x32xbf16>,
    return
  }
  func.func @transform_0(%arg0: i32, %arg1: i32) -> (i32, i32) {
    %c0_i32 = arith.constant 0 : i32
    %c0_i32_0 = arith.constant 0 : i32
    return %arg0, %c0_i32 : i32, i32
  }
  func.func @transform_1(%arg0: i32, %arg1: i32) -> (i32, i32) {
    %c0_i32 = arith.constant 0 : i32
    %c0_i32_0 = arith.constant 0 : i32
    return %c0_i32, %arg1 : i32, i32
  }
  func.func @transform_2(%arg0: i32, %arg1: i32) -> (i32, i32) {
    %c0_i32 = arith.constant 0 : i32
    %c0_i32_0 = arith.constant 0 : i32
    return %c0_i32, %arg1 : i32, i32
  }
  func.func @transform_3(%arg0: i32, %arg1: i32) -> (i32, i32) {
    %c0_i32 = arith.constant 0 : i32
    return %arg0, %arg1 : i32, i32
  }
}

</mosaic_0001>

<llo_original>
// kernel: tpu_custom_call.1
$region0: #{tpu_custom_call.1}
  #allocation0 [shape = 'u32[]', space=smem, size = 0x4, offset = 0x4, fixed_abs, tag = 'smem constant byte address 0x4 - core index']
  #allocation1 [shape = 'u32[144,128]{1,0:T(1,128)}', space=vmem, size = 0x12000, scoped, tag = 'internal scratch']
  %s0 = inlined_call_operand.vmem [shape: bf16[12544,27], index: 0, kind: input, shape index: {}]
  %s1 = inlined_call_operand.vmem [shape: bf16[27,32], index: 1, kind: input, shape index: {}]
  %s2 = inlined_call_operand.vmem [shape: f32[1,32], index: 2, kind: input, shape index: {}]
  %s3 = inlined_call_operand.vmem [shape: bf16[12544,32], index: 3, kind: output, shape index: {}]
  %s4 = sld [smem:[#allocation0]]
  $region45: #{tpu_custom_call.1} parent=0
    _
  %s6 = ssub.s32 1, %s4
  %s7 = scalar_select 0, %s6, %s4
  loop: start=0, step=1, limit=30
  $region2: #{tpu_custom_call.1} parent=0 // loop_pre_header
    _
  $region3: #{tpu_custom_call.1} parent=0 // loop_header
    %s9 = sphi 0, %s13
    %p10 = scmp.ge.s32.totalorder %s9, 30
    %s16 = sphi 0, %s28
    %s17 = sphi 0, %s24
    %s18 = sphi 0, %s16
    %s19 = sphi 0, %s17
    %s20 = sphi 0, %s18
    %s21 = sphi 0, %s19
    %s31 = sphi 0, %s33
    %s34 = sphi 0, %s31
    %s35 = sphi 0, %s34
    %s51 = sphi 0, %s35
    %s57 = sphi 0, %s59
    %s60 = sphi 0, %s57
    %s61 = sphi 0, %s60
    %s77 = sphi 0, %s61
    %s83 = sphi 0, %s85
    %s86 = sphi 0, %s83
    %s87 = sphi 0, %s86
    %s103 = sphi 0, %s87
    %s111 = sphi 0, %s113
    %s114 = sphi 0, %s111
    %s115 = sphi 0, %s114
    %s131 = sphi 0, %s115
  $region4: #{tpu_custom_call.1} parent=0 // loop_header_branch
    %12 = sbr.rel (%p10) target = $region8
  $region5: #{tpu_custom_call.1} parent=0 // loop_body
    %s14 = ssub.s32 %s9, 1
    %s15 = ssub.s32 %s9, 2
    %s22 = sadd.s32 1, %s17
    %p23 = scmp.ge.s32.totalorder %s22, 1
    %s24 = scalar_select %p23, 0, %s22
    %s25 = sadd.s32 1, %s16
    %s26 = scalar_select %p23, %s25, %s16
    %p27 = scmp.ge.s32.totalorder %s26, 28
    %s28 = scalar_select %p27, 0, %s26
    %s29 = ssub.s32 %s16, %s28
    %p30 = scmp.eq.s32.totalorder %s29, 0
    %s32 = sadd.s32 %s31, 1
    %s33 = scalar_select %p30, %s31, %s32
    %p36 = pneg %p30
    %p37 = scmp.eq.s32.totalorder %s9, 27
    %p38 = por %p36, %p37
    %p39 = scmp.ne.s32.totalorder %s31, %s34
    %p40 = scmp.eq.s32.totalorder %s9, 0
    %p41 = por %p39, %p40
    %p42 = scmp.ne.s32.totalorder %s31, %s34
    %p43 = scmp.eq.s32.totalorder %s14, 27
    %p44 = por %p42, %p43
    %p45 = scmp.ne.s32.totalorder %s34, %s35
    %p46 = scmp.eq.s32.totalorder %s14, 0
    %p47 = por %p45, %p46
    %p48 = scmp.ne.s32.totalorder %s34, %s35
    %p49 = scmp.eq.s32.totalorder %s15, 27
    %p50 = por %p48, %p49
    %p52 = scmp.ne.s32.totalorder %s35, %s51
    %p53 = scmp.eq.s32.totalorder %s15, 0
    %p54 = por %p52, %p53
    %s55 = ssub.s32 %s17, %s24
    %p56 = scmp.eq.s32.totalorder %s55, 0
    %s58 = sadd.s32 %s57, 1
    %s59 = scalar_select %p56, %s57, %s58
    %p62 = pneg %p56
    %p63 = scmp.eq.s32.totalorder %s9, 27
    %p64 = por %p62, %p63
    %p65 = scmp.ne.s32.totalorder %s57, %s60
    %p66 = scmp.eq.s32.totalorder %s9, 0
    %p67 = por %p65, %p66
    %p68 = scmp.ne.s32.totalorder %s57, %s60
    %p69 = scmp.eq.s32.totalorder %s14, 27
    %p70 = por %p68, %p69
    %p71 = scmp.ne.s32.totalorder %s60, %s61
    %p72 = scmp.eq.s32.totalorder %s14, 0
    %p73 = por %p71, %p72
    %p74 = scmp.ne.s32.totalorder %s60, %s61
    %p75 = scmp.eq.s32.totalorder %s15, 27
    %p76 = por %p74, %p75
    %p78 = scmp.ne.s32.totalorder %s61, %s77
    %p79 = scmp.eq.s32.totalorder %s15, 0
    %p80 = por %p78, %p79
    %s81 = ssub.s32 %s17, %s24
    %p82 = scmp.eq.s32.totalorder %s81, 0
    %s84 = sadd.s32 %s83, 1
    %s85 = scalar_select %p82, %s83, %s84
    %p88 = pneg %p82
    %p89 = scmp.eq.s32.totalorder %s9, 27
    %p90 = por %p88, %p89
    %p91 = scmp.ne.s32.totalorder %s83, %s86
    %p92 = scmp.eq.s32.totalorder %s9, 0
    %p93 = por %p91, %p92
    %p94 = scmp.ne.s32.totalorder %s83, %s86
    %p95 = scmp.eq.s32.totalorder %s14, 27
    %p96 = por %p94, %p95
    %p97 = scmp.ne.s32.totalorder %s86, %s87
    %p98 = scmp.eq.s32.totalorder %s14, 0
    %p99 = por %p97, %p98
    %p100 = scmp.ne.s32.totalorder %s86, %s87
    %p101 = scmp.eq.s32.totalorder %s15, 27
    %p102 = por %p100, %p101
    %p104 = scmp.ne.s32.totalorder %s87, %s103
    %p105 = scmp.eq.s32.totalorder %s15, 0
    %p106 = por %p104, %p105
    %s107 = ssub.s32 %s16, %s28
    %s108 = ssub.s32 %s17, %s24
    %s109 = sor.u32 %s107, %s108
    %p110 = scmp.eq.s32.totalorder %s109, 0
    %s112 = sadd.s32 %s111, 1
    %s113 = scalar_select %p110, %s111, %s112
    %p116 = pneg %p110
    %p117 = scmp.eq.s32.totalorder %s9, 27
    %p118 = por %p116, %p117
    %p119 = scmp.ne.s32.totalorder %s111, %s114
    %p120 = scmp.eq.s32.totalorder %s9, 0
    %p121 = por %p119, %p120
    %p122 = scmp.ne.s32.totalorder %s111, %s114
    %p123 = scmp.eq.s32.totalorder %s14, 27
    %p124 = por %p122, %p123
    %p125 = scmp.ne.s32.totalorder %s114, %s115
    %p126 = scmp.eq.s32.totalorder %s14, 0
    %p127 = por %p125, %p126
    %p128 = scmp.ne.s32.totalorder %s114, %s115
    %p129 = scmp.eq.s32.totalorder %s15, 27
    %p130 = por %p128, %p129
    %p132 = scmp.ne.s32.totalorder %s115, %s131
    %p133 = scmp.eq.s32.totalorder %s15, 0
    %p134 = por %p132, %p133
    %p135 = scmp.le.s32.totalorder 1, %s9
    %p136 = scmp.lt.s32.totalorder %s9, 29
    %p137 = pnand %p135, %p136
    %p138 = pneg %p137
    // Predicated region
    $region9: #{tpu_custom_call.1} parent=5 // pred_check
      _
    $region10: #{tpu_custom_call.1} parent=5 // pred_check_branch
      %140 = sbr.rel (%p137) target = $region12
    $region11: #{tpu_custom_call.1} parent=5 // pred_region
      %s141 = ssub.s32 %s9, 1
      // Predicated region
      $region13: #{tpu_custom_call.1} parent=11 // pred_check
        %p142 = pneg %p73
      $region14: #{tpu_custom_call.1} parent=11 // pred_check_branch
        %144 = sbr.rel (%p142) target = $region16
      $region15: #{tpu_custom_call.1} parent=11 // pred_region
        %p145 = scmp.lt.s32.totalorder %s19, 0
        %s146 = scalar_select %p145, %s19, 0
        %s147 = smul.addr %s146, 4
        %s148 = scalar_lea.vmem %s1, %s147
      $region16: #{tpu_custom_call.1} parent=11 // pred_fallthru
        _
      // Predicated region
      $region17: #{tpu_custom_call.1} parent=11 // pred_check
        %p149 = pneg %p99
      $region18: #{tpu_custom_call.1} parent=11 // pred_check_branch
        %151 = sbr.rel (%p149) target = $region20
      $region19: #{tpu_custom_call.1} parent=11 // pred_region
        %p152 = scmp.lt.s32.totalorder %s19, 0
        %s153 = scalar_select %p152, %s19, 0
        %s154 = scalar_lea.vmem %s2, %s153
      $region20: #{tpu_custom_call.1} parent=11 // pred_fallthru
        _
    $region12: #{tpu_custom_call.1} parent=5 // pred_fallthru
      _
    %p155 = scmp.lt.s32.totalorder %s9, 28
    // Predicated region
    $region21: #{tpu_custom_call.1} parent=5 // pred_check
      %p156 = pneg %p155
    $region22: #{tpu_custom_call.1} parent=5 // pred_check_branch
      %158 = sbr.rel (%p156) target = $region24
    $region23: #{tpu_custom_call.1} parent=5 // pred_region
      // Predicated region
      $region25: #{tpu_custom_call.1} parent=23 // pred_check
        %p159 = pneg %p41
      $region26: #{tpu_custom_call.1} parent=23 // pred_check_branch
        %161 = sbr.rel (%p159) target = $region28
      $region27: #{tpu_custom_call.1} parent=23 // pred_region
        %s162 = smul.u32 56, %s16
        %p163 = scmp.lt.s32.totalorder %s162, 1567
        %s164 = scalar_select %p163, %s162, 1567
        %s165 = smul.addr %s164, 4
        %s166 = scalar_lea.vmem %s0, %s165
        %s167 = smul.u32 56, %s16
      $region28: #{tpu_custom_call.1} parent=23 // pred_fallthru
        _
    $region24: #{tpu_custom_call.1} parent=5 // pred_fallthru
      _
    %p168 = scmp.le.s32.totalorder 1, %s9
    %p169 = scmp.lt.s32.totalorder %s9, 29
    %p170 = pnand %p168, %p169
    %p171 = pneg %p170
    // Predicated region
    $region29: #{tpu_custom_call.1} parent=5 // pred_check
      _
    $region30: #{tpu_custom_call.1} parent=5 // pred_check_branch
      %173 = sbr.rel (%p170) target = $region32
    $region31: #{tpu_custom_call.1} parent=5 // pred_region
      %s174 = ssub.s32 %s9, 1
      %s175 = smul.u32 56, %s18
      %p176 = scmp.lt.s32.totalorder %s175, 1567
      %s177 = scalar_select %p176, %s175, 1567
      %s178 = smul.addr %s177, 4
      %s179 = scalar_lea.vmem %s0, %s178
      %p180 = pneg %p47
      %p181 = pneg %p44
      %p182 = scmp.lt.s32.totalorder %s19, 0
      %s183 = scalar_select %p182, %s19, 0
      %s184 = smul.addr %s183, 4
      %s185 = scalar_lea.vmem %s1, %s184
      %p186 = pneg %p73
      %p187 = pneg %p70
      %p188 = scmp.lt.s32.totalorder %s19, 0
      %s189 = scalar_select %p188, %s19, 0
      %s190 = scalar_lea.vmem %s2, %s189
      %p191 = pneg %p99
      %p192 = pneg %p96
      %p193 = pneg %p127
      %p194 = pneg %p124
      %s195 = smul.u32 56, %s18
      %p196 = scmp.lt.s32.totalorder %s195, 1567
      %s197 = scalar_select %p196, %s195, 1567
      %p198 = scmp.lt.s32.totalorder %s19, 0
      %s199 = scalar_select %p198, %s19, 0
      %s200 = sadd.s32 %s199, %s197
      %s201 = smul.addr %s200, 4
      %s202 = scalar_lea.vmem %s3, %s201
      %s203 = smul.u32 56, %s18
      %p204 = scmp.lt.s32.totalorder %s203, 1567
      %s205 = scalar_select %p204, %s203, 1567
      %s206 = smul.addr %s205, 4
      %s207 = scalar_lea.vmem %s0, %s206
      %s208 = smul.u32 56, %s18
      %p209 = scmp.lt.s32.totalorder %s19, 0
      %s210 = scalar_select %p209, %s19, 0
      %s211 = smul.addr %s210, 4
      %s212 = scalar_lea.vmem %s1, %s211
      %p213 = scmp.lt.s32.totalorder %s19, 0
      %s214 = scalar_select %p213, %s19, 0
      %s215 = scalar_lea.vmem %s2, %s214
      %s216 = smul.u32 56, %s18
      %p217 = scmp.lt.s32.totalorder %s216, 1567
      %s218 = scalar_select %p217, %s216, 1567
      %p219 = scmp.lt.s32.totalorder %s19, 0
      %s220 = scalar_select %p219, %s19, 0
      %s221 = sadd.s32 %s220, %s218
      %s222 = smul.addr %s221, 4
      %s223 = scalar_lea.vmem %s3, %s222
      %s224 = smul.u32 56, %s18
      %v226 = vld [vmem:[%s207] sm:$0xf]
      %v227 = vld [vmem:[%s207 + $0x4] sm:$0xf]
      %v228 = vld [vmem:[%s207 + $0x8] sm:$0xf]
      %v229 = vld [vmem:[%s207 + $0xc] sm:$0xf]
      %v230 = vld [vmem:[%s207 + $0x10] sm:$0xf]
      %v231 = vld [vmem:[%s207 + $0x14] sm:$0xf]
      %v232 = vld [vmem:[%s207 + $0x18] sm:$0xf]
      %v233 = vld [vmem:[%s207 + $0x1c] sm:$0xf]
      %v234 = vld [vmem:[%s207 + $0x20] sm:$0xf]
      %v235 = vld [vmem:[%s207 + $0x24] sm:$0xf]
      %v236 = vld [vmem:[%s207 + $0x28] sm:$0xf]
      %v237 = vld [vmem:[%s207 + $0x2c] sm:$0xf]
      %v238 = vld [vmem:[%s207 + $0x30] sm:$0xf]
      %v239 = vld [vmem:[%s207 + $0x34] sm:$0xf]
      %v240 = vld [vmem:[%s207 + $0x38] sm:$0xf]
      %v241 = vld [vmem:[%s207 + $0x3c] sm:$0xf]
      %v242 = vld [vmem:[%s207 + $0x40] sm:$0xf]
      %v243 = vld [vmem:[%s207 + $0x44] sm:$0xf]
      %v244 = vld [vmem:[%s207 + $0x48] sm:$0xf]
      %v245 = vld [vmem:[%s207 + $0x4c] sm:$0xf]
      %v246 = vld [vmem:[%s207 + $0x50] sm:$0xf]
      %v247 = vld [vmem:[%s207 + $0x54] sm:$0xf]
      %v248 = vld [vmem:[%s207 + $0x58] sm:$0xf]
      %v249 = vld [vmem:[%s207 + $0x5c] sm:$0xf]
      %v250 = vld [vmem:[%s207 + $0x60] sm:$0xf]
      %v251 = vld [vmem:[%s207 + $0x64] sm:$0xf]
      %v252 = vld [vmem:[%s207 + $0x68] sm:$0xf]
      %v253 = vld [vmem:[%s207 + $0x6c] sm:$0xf]
      %v254 = vld [vmem:[%s207 + $0x70] sm:$0xf]
      %v255 = vld [vmem:[%s207 + $0x74] sm:$0xf]
      %v256 = vld [vmem:[%s207 + $0x78] sm:$0xf]
      %v257 = vld [vmem:[%s207 + $0x7c] sm:$0xf]
      %v258 = vld [vmem:[%s207 + $0x80] sm:$0xf]
      %v259 = vld [vmem:[%s207 + $0x84] sm:$0xf]
      %v260 = vld [vmem:[%s207 + $0x88] sm:$0xf]
      %v261 = vld [vmem:[%s207 + $0x8c] sm:$0xf]
      %v262 = vld [vmem:[%s207 + $0x90] sm:$0xf]
      %v263 = vld [vmem:[%s207 + $0x94] sm:$0xf]
      %v264 = vld [vmem:[%s207 + $0x98] sm:$0xf]
      %v265 = vld [vmem:[%s207 + $0x9c] sm:$0xf]
      %v266 = vld [vmem:[%s207 + $0xa0] sm:$0xf]
      %v267 = vld [vmem:[%s207 + $0xa4] sm:$0xf]
      %v268 = vld [vmem:[%s207 + $0xa8] sm:$0xf]
      %v269 = vld [vmem:[%s207 + $0xac] sm:$0xf]
      %v270 = vld [vmem:[%s207 + $0xb0] sm:$0xf]
      %v271 = vld [vmem:[%s207 + $0xb4] sm:$0xf]
      %v272 = vld [vmem:[%s207 + $0xb8] sm:$0xf]
      %v273 = vld [vmem:[%s207 + $0xbc] sm:$0xf]
      %v274 = vld [vmem:[%s207 + $0xc0] sm:$0xf]
      %v275 = vld [vmem:[%s207 + $0xc4] sm:$0xf]
      %v276 = vld [vmem:[%s207 + $0xc8] sm:$0xf]
      %v277 = vld [vmem:[%s207 + $0xcc] sm:$0xf]
      %v278 = vld [vmem:[%s207 + $0xd0] sm:$0xf]
      %v279 = vld [vmem:[%s207 + $0xd4] sm:$0xf]
      %v280 = vld [vmem:[%s207 + $0xd8] sm:$0xf]
      %v281 = vld [vmem:[%s207 + $0xdc] sm:$0xf]
      %v282 = vld [vmem:[%s212] sm:$0xf]
      %v283 = vld [vmem:[%s212 + $0x4] sm:$0xf]
      %v284 = vld [vmem:[%s212 + $0x8] sm:$0xf]
      %v285 = vld [vmem:[%s212 + $0xc] sm:$0x3]
      %v286 = vld [vmem:[%s215] sm:$0x1]
      %v288 = vlaneseq
      %v289 = vshrl.u32 %v288, 7
      %v290 = vsub.s32 0, %v289
      %v291 = vrot.slane %v286, %v290
      %v349 = vunpack.c.l.b16 %v226
      %v350 = vunpack.c.l.b16 %v227
      %v351 = vunpack.c.l.b16 %v228
      %v352 = vunpack.c.l.b16 %v229
      %v353 = vunpack.c.l.b16 %v230
      %v354 = vunpack.c.l.b16 %v231
      %v355 = vunpack.c.l.b16 %v232
      %v356 = vunpack.c.l.b16 %v233
      %v357 = vunpack.c.l.b16 %v234
      %v358 = vunpack.c.l.b16 %v235
      %v359 = vunpack.c.l.b16 %v236
      %v360 = vunpack.c.l.b16 %v237
      %v361 = vunpack.c.l.b16 %v238
      %v362 = vunpack.c.l.b16 %v239
      %v363 = vunpack.c.l.b16 %v240
      %v364 = vunpack.c.l.b16 %v241
      %v365 = vunpack.c.l.b16 %v242
      %v366 = vunpack.c.l.b16 %v243
      %v367 = vunpack.c.l.b16 %v244
      %v368 = vunpack.c.l.b16 %v245
      %v369 = vunpack.c.l.b16 %v246
      %v370 = vunpack.c.l.b16 %v247
      %v371 = vunpack.c.l.b16 %v248
      %v372 = vunpack.c.l.b16 %v249
      %v373 = vunpack.c.l.b16 %v250
      %v374 = vunpack.c.l.b16 %v251
      %v375 = vunpack.c.l.b16 %v252
      %v376 = vunpack.c.l.b16 %v253
      %v377 = vunpack.c.l.b16 %v254
      %v378 = vunpack.c.l.b16 %v255
      %v379 = vunpack.c.l.b16 %v256
      %v380 = vunpack.c.l.b16 %v257
      %v381 = vunpack.c.l.b16 %v258
      %v382 = vunpack.c.l.b16 %v259
      %v383 = vunpack.c.l.b16 %v260
      %v384 = vunpack.c.l.b16 %v261
      %v385 = vunpack.c.l.b16 %v262
      %v386 = vunpack.c.l.b16 %v263
      %v387 = vunpack.c.l.b16 %v264
      %v388 = vunpack.c.l.b16 %v265
      %v389 = vunpack.c.l.b16 %v266
      %v390 = vunpack.c.l.b16 %v267
      %v391 = vunpack.c.l.b16 %v268
      %v392 = vunpack.c.l.b16 %v269
      %v393 = vunpack.c.l.b16 %v270
      %v394 = vunpack.c.l.b16 %v271
      %v395 = vunpack.c.l.b16 %v272
      %v396 = vunpack.c.l.b16 %v273
      %v397 = vunpack.c.l.b16 %v274
      %v398 = vunpack.c.l.b16 %v275
      %v399 = vunpack.c.l.b16 %v276
      %v400 = vunpack.c.l.b16 %v277
      %v401 = vunpack.c.l.b16 %v278
      %v402 = vunpack.c.l.b16 %v279
      %v403 = vunpack.c.l.b16 %v280
      %v404 = vunpack.c.l.b16 %v281
      %v405 = vpack.c.b16 %v350, %v349
      %v406 = vpack.c.b16 %v352, %v351
      %v407 = vpack.c.b16 %v354, %v353
      %v408 = vpack.c.b16 %v356, %v355
      %v409 = vpack.c.b16 %v358, %v357
      %v410 = vpack.c.b16 %v360, %v359
      %v411 = vpack.c.b16 %v362, %v361
      %v412 = vpack.c.b16 %v364, %v363
      %v413 = vpack.c.b16 %v366, %v365
      %v414 = vpack.c.b16 %v368, %v367
      %v415 = vpack.c.b16 %v370, %v369
      %v416 = vpack.c.b16 %v372, %v371
      %v417 = vpack.c.b16 %v374, %v373
      %v418 = vpack.c.b16 %v376, %v375
      %v419 = vpack.c.b16 %v378, %v377
      %v420 = vpack.c.b16 %v380, %v379
      %v421 = vpack.c.b16 %v382, %v381
      %v422 = vpack.c.b16 %v384, %v383
      %v423 = vpack.c.b16 %v386, %v385
      %v424 = vpack.c.b16 %v388, %v387
      %v425 = vpack.c.b16 %v390, %v389
      %v426 = vpack.c.b16 %v392, %v391
      %v427 = vpack.c.b16 %v394, %v393
      %v428 = vpack.c.b16 %v396, %v395
      %v429 = vpack.c.b16 %v398, %v397
      %v430 = vpack.c.b16 %v400, %v399
      %v431 = vpack.c.b16 %v402, %v401
      %v432 = vpack.c.b16 %v404, %v403
      %v437 = vunpack.c.l.b16 %v282
      %v438 = vunpack.c.l.b16 %v283
      %v439 = vunpack.c.l.b16 %v284
      %v440 = vunpack.c.l.b16 %v285
      %v441 = vpack.c.b16 %v438, %v437
      %v442 = vpack.c.b16 %v440, %v439
      %vm444 = vcmask 220160
      %v446 = vsel %vm444, %v405, 0
      %v449 = vsel %vm444, %v406, 0
      %v452 = vsel %vm444, %v407, 0
      %v455 = vsel %vm444, %v408, 0
      %v458 = vsel %vm444, %v409, 0
      %v461 = vsel %vm444, %v410, 0
      %v464 = vsel %vm444, %v411, 0
      %v467 = vsel %vm444, %v412, 0
      %v470 = vsel %vm444, %v413, 0
      %v473 = vsel %vm444, %v414, 0
      %v476 = vsel %vm444, %v415, 0
      %v479 = vsel %vm444, %v416, 0
      %v482 = vsel %vm444, %v417, 0
      %v485 = vsel %vm444, %v418, 0
      %v488 = vsel %vm444, %v419, 0
      %v491 = vsel %vm444, %v420, 0
      %v494 = vsel %vm444, %v421, 0
      %v497 = vsel %vm444, %v422, 0
      %v500 = vsel %vm444, %v423, 0
      %v503 = vsel %vm444, %v424, 0
      %v506 = vsel %vm444, %v425, 0
      %v509 = vsel %vm444, %v426, 0
      %v512 = vsel %vm444, %v427, 0
      %v515 = vsel %vm444, %v428, 0
      %v518 = vsel %vm444, %v429, 0
      %v521 = vsel %vm444, %v430, 0
      %v524 = vsel %vm444, %v431, 0
      %v527 = vsel %vm444, %v432, 0
      %vm529 = vcmask 1044480
      %vm530 = vcmask 1045504
      %v531 = vsel %vm529, 4294967295, 65535
      %v532 = vsel %vm530, %v531, 0
      %v534 = vand.u32 %v442, %v532
      %536 = vmatprep.subr.bf16.mxu0 0
      %537 = vmatpush1.bf16.msra.mxu0 %v441
      %538 = vmatprep.subr.bf16.mxu0 0
      %539 = vmatpush1.bf16.msra.mxu0 %v534
      %540 = vmatprep.subr.bf16.mxu0 0
      %541 = vmatpush1.bf16.msra.mxu0 0
      %542 = vmatprep.subr.bf16.mxu0 0
      %543 = vmatpush1.bf16.msra.mxu0 0
      %544 = vmatprep.subr.bf16.mxu0 0
      %545 = vmatpush1.bf16.msra.mxu0 0
      %546 = vmatprep.subr.bf16.mxu0 0
      %547 = vmatpush1.bf16.msra.mxu0 0
      %548 = vmatprep.subr.bf16.mxu0 0
      %549 = vmatpush1.bf16.msra.mxu0 0
      %550 = vmatprep.subr.bf16.mxu0 0
      %551 = vmatpush1.bf16.msra.mxu0 0
      %552 = vmatprep.subr.bf16.mxu0 0
      %553 = vmatpush1.bf16.msra.mxu0 0
      %554 = vmatprep.subr.bf16.mxu0 0
      %555 = vmatpush1.bf16.msra.mxu0 0
      %556 = vmatprep.subr.bf16.mxu0 0
      %557 = vmatpush1.bf16.msra.mxu0 0
      %558 = vmatprep.subr.bf16.mxu0 0
      %559 = vmatpush1.bf16.msra.mxu0 0
      %560 = vmatprep.subr.bf16.mxu0 0
      %561 = vmatpush1.bf16.msra.mxu0 0
      %562 = vmatprep.subr.bf16.mxu0 0
      %563 = vmatpush1.bf16.msra.mxu0 0
      %564 = vmatprep.subr.bf16.mxu0 0
      %565 = vmatpush1.bf16.msra.mxu0 0
      %566 = vmatprep.subr.bf16.mxu0 0
      %567 = vmatpush1.bf16.msra.mxu0 0
      %568 = vmatprep.mubr.bf16.mxu0 0
      %569 = vmatmul.mubr.bf16.gmra.mrb[0].mxu0 %v446
      %v570 = vpop.f32.mrb[0].mxu0
      %v571 = vadd.f32 %v291, %v570
      %v572 = vpop.f32.mrb[0].mxu0
      %v573 = vpop.f32.mrb[0].mxu0
      %v574 = vadd.f32 %v291, %v573
      %v575 = vpop.f32.mrb[0].mxu0
      %576 = vmatprep.mubr.bf16.mxu0 0
      %577 = vmatmul.mubr.bf16.gmra.mrb[0].mxu0 %v449
      %v578 = vpop.f32.mrb[0].mxu0
      %v579 = vadd.f32 %v291, %v578
      %v580 = vpop.f32.mrb[0].mxu0
      %v581 = vpop.f32.mrb[0].mxu0
      %v582 = vadd.f32 %v291, %v581
      %v583 = vpop.f32.mrb[0].mxu0
      %584 = vmatprep.mubr.bf16.mxu0 0
      %585 = vmatmul.mubr.bf16.gmra.mrb[0].mxu0 %v452
      %v586 = vpop.f32.mrb[0].mxu0
      %v587 = vadd.f32 %v291, %v586
      %v588 = vpop.f32.mrb[0].mxu0
      %v589 = vpop.f32.mrb[0].mxu0
      %v590 = vadd.f32 %v291, %v589
      %v591 = vpop.f32.mrb[0].mxu0
      %592 = vmatprep.mubr.bf16.mxu0 0
      %593 = vmatmul.mubr.bf16.gmra.mrb[0].mxu0 %v455
      %v594 = vpop.f32.mrb[0].mxu0
      %v595 = vadd.f32 %v291, %v594
      %v596 = vpop.f32.mrb[0].mxu0
      %v597 = vpop.f32.mrb[0].mxu0
      %v598 = vadd.f32 %v291, %v597
      %v599 = vpop.f32.mrb[0].mxu0
      %600 = vmatprep.mubr.bf16.mxu0 0
      %601 = vmatmul.mubr.bf16.gmra.mrb[0].mxu0 %v458
      %v602 = vpop.f32.mrb[0].mxu0
      %v603 = vadd.f32 %v291, %v602
      %v604 = vpop.f32.mrb[0].mxu0
      %v605 = vpop.f32.mrb[0].mxu0
      %v606 = vadd.f32 %v291, %v605
      %v607 = vpop.f32.mrb[0].mxu0
      %608 = vmatprep.mubr.bf16.mxu0 0
      %609 = vmatmul.mubr.bf16.gmra.mrb[0].mxu0 %v461
      %v610 = vpop.f32.mrb[0].mxu0
      %v611 = vadd.f32 %v291, %v610
      %v612 = vpop.f32.mrb[0].mxu0
      %v613 = vpop.f32.mrb[0].mxu0
      %v614 = vadd.f32 %v291, %v613
      %v615 = vpop.f32.mrb[0].mxu0
      %616 = vmatprep.mubr.bf16.mxu0 0
      %617 = vmatmul.mubr.bf16.gmra.mrb[0].mxu0 %v464
      %v618 = vpop.f32.mrb[0].mxu0
      %v619 = vadd.f32 %v291, %v618
      %v620 = vpop.f32.mrb[0].mxu0
      %v621 = vpop.f32.mrb[0].mxu0
      %v622 = vadd.f32 %v291, %v621
      %v623 = vpop.f32.mrb[0].mxu0
      %624 = vmatprep.mubr.bf16.mxu0 0
      %625 = vmatmul.mubr.bf16.gmra.mrb[0].mxu0 %v467
      %v626 = vpop.f32.mrb[0].mxu0
      %v627 = vadd.f32 %v291, %v626
      %v628 = vpop.f32.mrb[0].mxu0
      %v629 = vpop.f32.mrb[0].mxu0
      %v630 = vadd.f32 %v291, %v629
      %v631 = vpop.f32.mrb[0].mxu0
      %632 = vmatprep.mubr.bf16.mxu0 0
      %633 = vmatmul.mubr.bf16.gmra.mrb[0].mxu0 %v470
      %v634 = vpop.f32.mrb[0].mxu0
      %v635 = vadd.f32 %v291, %v634
      %v636 = vpop.f32.mrb[0].mxu0
      %v637 = vpop.f32.mrb[0].mxu0
      %v638 = vadd.f32 %v291, %v637
      %v639 = vpop.f32.mrb[0].mxu0
      %640 = vmatprep.mubr.bf16.mxu0 0
      %641 = vmatmul.mubr.bf16.gmra.mrb[0].mxu0 %v473
      %v642 = vpop.f32.mrb[0].mxu0
      %v643 = vadd.f32 %v291, %v642
      %v644 = vpop.f32.mrb[0].mxu0
      %v645 = vpop.f32.mrb[0].mxu0
      %v646 = vadd.f32 %v291, %v645
      %v647 = vpop.f32.mrb[0].mxu0
      %648 = vmatprep.mubr.bf16.mxu0 0
      %649 = vmatmul.mubr.bf16.gmra.mrb[0].mxu0 %v476
      %v650 = vpop.f32.mrb[0].mxu0
      %v651 = vadd.f32 %v291, %v650
      %v652 = vpop.f32.mrb[0].mxu0
      %v653 = vpop.f32.mrb[0].mxu0
      %v654 = vadd.f32 %v291, %v653
      %v655 = vpop.f32.mrb[0].mxu0
      %656 = vmatprep.mubr.bf16.mxu0 0
      %657 = vmatmul.mubr.bf16.gmra.mrb[0].mxu0 %v479
      %v658 = vpop.f32.mrb[0].mxu0
      %v659 = vadd.f32 %v291, %v658
      %v660 = vpop.f32.mrb[0].mxu0
      %v661 = vpop.f32.mrb[0].mxu0
      %v662 = vadd.f32 %v291, %v661
      %v663 = vpop.f32.mrb[0].mxu0
      %664 = vmatprep.mubr.bf16.mxu0 0
      %665 = vmatmul.mubr.bf16.gmra.mrb[0].mxu0 %v482
      %v666 = vpop.f32.mrb[0].mxu0
      %v667 = vadd.f32 %v291, %v666
      %v668 = vpop.f32.mrb[0].mxu0
      %v669 = vpop.f32.mrb[0].mxu0
      %v670 = vadd.f32 %v291, %v669
      %v671 = vpop.f32.mrb[0].mxu0
      %672 = vmatprep.mubr.bf16.mxu0 0
      %673 = vmatmul.mubr.bf16.gmra.mrb[0].mxu0 %v485
      %v674 = vpop.f32.mrb[0].mxu0
      %v675 = vadd.f32 %v291, %v674
      %v676 = vpop.f32.mrb[0].mxu0
      %v677 = vpop.f32.mrb[0].mxu0
      %v678 = vadd.f32 %v291, %v677
      %v679 = vpop.f32.mrb[0].mxu0
      %680 = vmatprep.mubr.bf16.mxu0 0
      %681 = vmatmul.mubr.bf16.gmra.mrb[0].mxu0 %v488
      %v682 = vpop.f32.mrb[0].mxu0
      %v683 = vadd.f32 %v291, %v682
      %v684 = vpop.f32.mrb[0].mxu0
      %v685 = vpop.f32.mrb[0].mxu0
      %v686 = vadd.f32 %v291, %v685
      %v687 = vpop.f32.mrb[0].mxu0
      %688 = vmatprep.mubr.bf16.mxu0 0
      %689 = vmatmul.mubr.bf16.gmra.mrb[0].mxu0 %v491
      %v690 = vpop.f32.mrb[0].mxu0
      %v691 = vadd.f32 %v291, %v690
      %v692 = vpop.f32.mrb[0].mxu0
      %v693 = vpop.f32.mrb[0].mxu0
      %v694 = vadd.f32 %v291, %v693
      %v695 = vpop.f32.mrb[0].mxu0
      %696 = vmatprep.mubr.bf16.mxu0 0
      %697 = vmatmul.mubr.bf16.gmra.mrb[0].mxu0 %v494
      %v698 = vpop.f32.mrb[0].mxu0
      %v699 = vadd.f32 %v291, %v698
      %v700 = vpop.f32.mrb[0].mxu0
      %v701 = vpop.f32.mrb[0].mxu0
      %v702 = vadd.f32 %v291, %v701
      %v703 = vpop.f32.mrb[0].mxu0
      %704 = vmatprep.mubr.bf16.mxu0 0
      %705 = vmatmul.mubr.bf16.gmra.mrb[0].mxu0 %v497
      %v706 = vpop.f32.mrb[0].mxu0
      %v707 = vadd.f32 %v291, %v706
      %v708 = vpop.f32.mrb[0].mxu0
      %v709 = vpop.f32.mrb[0].mxu0
      %v710 = vadd.f32 %v291, %v709
      %v711 = vpop.f32.mrb[0].mxu0
      %712 = vmatprep.mubr.bf16.mxu0 0
      %713 = vmatmul.mubr.bf16.gmra.mrb[0].mxu0 %v500
      %v714 = vpop.f32.mrb[0].mxu0
      %v715 = vadd.f32 %v291, %v714
      %v716 = vpop.f32.mrb[0].mxu0
      %v717 = vpop.f32.mrb[0].mxu0
      %v718 = vadd.f32 %v291, %v717
      %v719 = vpop.f32.mrb[0].mxu0
      %720 = vmatprep.mubr.bf16.mxu0 0
      %721 = vmatmul.mubr.bf16.gmra.mrb[0].mxu0 %v503
      %v722 = vpop.f32.mrb[0].mxu0
      %v723 = vadd.f32 %v291, %v722
      %v724 = vpop.f32.mrb[0].mxu0
      %v725 = vpop.f32.mrb[0].mxu0
      %v726 = vadd.f32 %v291, %v725
      %v727 = vpop.f32.mrb[0].mxu0
      %728 = vmatprep.mubr.bf16.mxu0 0
      %729 = vmatmul.mubr.bf16.gmra.mrb[0].mxu0 %v506
      %v730 = vpop.f32.mrb[0].mxu0
      %v731 = vadd.f32 %v291, %v730
      %v732 = vpop.f32.mrb[0].mxu0
      %v733 = vpop.f32.mrb[0].mxu0
      %v734 = vadd.f32 %v291, %v733
      %v735 = vpop.f32.mrb[0].mxu0
      %736 = vmatprep.mubr.bf16.mxu0 0
      %737 = vmatmul.mubr.bf16.gmra.mrb[0].mxu0 %v509
      %v738 = vpop.f32.mrb[0].mxu0
      %v739 = vadd.f32 %v291, %v738
      %v740 = vpop.f32.mrb[0].mxu0
      %v741 = vpop.f32.mrb[0].mxu0
      %v742 = vadd.f32 %v291, %v741
      %v743 = vpop.f32.mrb[0].mxu0
      %744 = vmatprep.mubr.bf16.mxu0 0
      %745 = vmatmul.mubr.bf16.gmra.mrb[0].mxu0 %v512
      %v746 = vpop.f32.mrb[0].mxu0
      %v747 = vadd.f32 %v291, %v746
      %v748 = vpop.f32.mrb[0].mxu0
      %v749 = vpop.f32.mrb[0].mxu0
      %v750 = vadd.f32 %v291, %v749
      %v751 = vpop.f32.mrb[0].mxu0
      %752 = vmatprep.mubr.bf16.mxu0 0
      %753 = vmatmul.mubr.bf16.gmra.mrb[0].mxu0 %v515
      %v754 = vpop.f32.mrb[0].mxu0
      %v755 = vadd.f32 %v291, %v754
      %v756 = vpop.f32.mrb[0].mxu0
      %v757 = vpop.f32.mrb[0].mxu0
      %v758 = vadd.f32 %v291, %v757
      %v759 = vpop.f32.mrb[0].mxu0
      %760 = vmatprep.mubr.bf16.mxu0 0
      %761 = vmatmul.mubr.bf16.gmra.mrb[0].mxu0 %v518
      %v762 = vpop.f32.mrb[0].mxu0
      %v763 = vadd.f32 %v291, %v762
      %v764 = vpop.f32.mrb[0].mxu0
      %v765 = vpop.f32.mrb[0].mxu0
      %v766 = vadd.f32 %v291, %v765
      %v767 = vpop.f32.mrb[0].mxu0
      %768 = vmatprep.mubr.bf16.mxu0 0
      %769 = vmatmul.mubr.bf16.gmra.mrb[0].mxu0 %v521
      %v770 = vpop.f32.mrb[0].mxu0
      %v771 = vadd.f32 %v291, %v770
      %v772 = vpop.f32.mrb[0].mxu0
      %v773 = vpop.f32.mrb[0].mxu0
      %v774 = vadd.f32 %v291, %v773
      %v775 = vpop.f32.mrb[0].mxu0
      %776 = vmatprep.mubr.bf16.mxu0 0
      %777 = vmatmul.mubr.bf16.gmra.mrb[0].mxu0 %v524
      %v778 = vpop.f32.mrb[0].mxu0
      %v779 = vadd.f32 %v291, %v778
      %v780 = vpop.f32.mrb[0].mxu0
      %v781 = vpop.f32.mrb[0].mxu0
      %v782 = vadd.f32 %v291, %v781
      %v783 = vpop.f32.mrb[0].mxu0
      %784 = vmatprep.mubr.bf16.mxu0 0
      %785 = vmatmul.mubr.bf16.gmra.mrb[0].mxu0 %v527
      %v786 = vpop.f32.mrb[0].mxu0
      %v787 = vadd.f32 %v291, %v786
      %v788 = vpop.f32.mrb[0].mxu0
      %v789 = vpop.f32.mrb[0].mxu0
      %v790 = vadd.f32 %v291, %v789
      %v791 = vpop.f32.mrb[0].mxu0
      %792 = vdwg.mxu0
      %v793 = vmax.f32 %v571, 0.0
      %v794 = vmax.f32 %v574, 0.0
      %v795 = vmax.f32 %v579, 0.0
      %v796 = vmax.f32 %v582, 0.0
      %v797 = vmax.f32 %v587, 0.0
      %v798 = vmax.f32 %v590, 0.0
      %v799 = vmax.f32 %v595, 0.0
      %v800 = vmax.f32 %v598, 0.0
      %v801 = vmax.f32 %v603, 0.0
      %v802 = vmax.f32 %v606, 0.0
      %v803 = vmax.f32 %v611, 0.0
      %v804 = vmax.f32 %v614, 0.0
      %v805 = vmax.f32 %v619, 0.0
      %v806 = vmax.f32 %v622, 0.0
      %v807 = vmax.f32 %v627, 0.0
      %v808 = vmax.f32 %v630, 0.0
      %v809 = vmax.f32 %v635, 0.0
      %v810 = vmax.f32 %v638, 0.0
      %v811 = vmax.f32 %v643, 0.0
      %v812 = vmax.f32 %v646, 0.0
      %v813 = vmax.f32 %v651, 0.0
      %v814 = vmax.f32 %v654, 0.0
      %v815 = vmax.f32 %v659, 0.0
      %v816 = vmax.f32 %v662, 0.0
      %v817 = vmax.f32 %v667, 0.0
      %v818 = vmax.f32 %v670, 0.0
      %v819 = vmax.f32 %v675, 0.0
      %v820 = vmax.f32 %v678, 0.0
      %v821 = vmax.f32 %v683, 0.0
      %v822 = vmax.f32 %v686, 0.0
      %v823 = vmax.f32 %v691, 0.0
      %v824 = vmax.f32 %v694, 0.0
      %v825 = vmax.f32 %v699, 0.0
      %v826 = vmax.f32 %v702, 0.0
      %v827 = vmax.f32 %v707, 0.0
      %v828 = vmax.f32 %v710, 0.0
      %v829 = vmax.f32 %v715, 0.0
      %v830 = vmax.f32 %v718, 0.0
      %v831 = vmax.f32 %v723, 0.0
      %v832 = vmax.f32 %v726, 0.0
      %v833 = vmax.f32 %v731, 0.0
      %v834 = vmax.f32 %v734, 0.0
      %v835 = vmax.f32 %v739, 0.0
      %v836 = vmax.f32 %v742, 0.0
      %v837 = vmax.f32 %v747, 0.0
      %v838 = vmax.f32 %v750, 0.0
      %v839 = vmax.f32 %v755, 0.0
      %v840 = vmax.f32 %v758, 0.0
      %v841 = vmax.f32 %v763, 0.0
      %v842 = vmax.f32 %v766, 0.0
      %v843 = vmax.f32 %v771, 0.0
      %v844 = vmax.f32 %v774, 0.0
      %v845 = vmax.f32 %v779, 0.0
      %v846 = vmax.f32 %v782, 0.0
      %v847 = vmax.f32 %v787, 0.0
      %v848 = vmax.f32 %v790, 0.0
      %v849 = vmin.f32 %v793, 6.0
      %v850 = vmin.f32 %v794, 6.0
      %v851 = vmin.f32 %v795, 6.0
      %v852 = vmin.f32 %v796, 6.0
      %v853 = vmin.f32 %v797, 6.0
      %v854 = vmin.f32 %v798, 6.0
      %v855 = vmin.f32 %v799, 6.0
      %v856 = vmin.f32 %v800, 6.0
      %v857 = vmin.f32 %v801, 6.0
      %v858 = vmin.f32 %v802, 6.0
      %v859 = vmin.f32 %v803, 6.0
      %v860 = vmin.f32 %v804, 6.0
      %v861 = vmin.f32 %v805, 6.0
      %v862 = vmin.f32 %v806, 6.0
      %v863 = vmin.f32 %v807, 6.0
      %v864 = vmin.f32 %v808, 6.0
      %v865 = vmin.f32 %v809, 6.0
      %v866 = vmin.f32 %v810, 6.0
      %v867 = vmin.f32 %v811, 6.0
      %v868 = vmin.f32 %v812, 6.0
      %v869 = vmin.f32 %v813, 6.0
      %v870 = vmin.f32 %v814, 6.0
      %v871 = vmin.f32 %v815, 6.0
      %v872 = vmin.f32 %v816, 6.0
      %v873 = vmin.f32 %v817, 6.0
      %v874 = vmin.f32 %v818, 6.0
      %v875 = vmin.f32 %v819, 6.0
      %v876 = vmin.f32 %v820, 6.0
      %v877 = vmin.f32 %v821, 6.0
      %v878 = vmin.f32 %v822, 6.0
      %v879 = vmin.f32 %v823, 6.0
      %v880 = vmin.f32 %v824, 6.0
      %v881 = vmin.f32 %v825, 6.0
      %v882 = vmin.f32 %v826, 6.0
      %v883 = vmin.f32 %v827, 6.0
      %v884 = vmin.f32 %v828, 6.0
      %v885 = vmin.f32 %v829, 6.0
      %v886 = vmin.f32 %v830, 6.0
      %v887 = vmin.f32 %v831, 6.0
      %v888 = vmin.f32 %v832, 6.0
      %v889 = vmin.f32 %v833, 6.0
      %v890 = vmin.f32 %v834, 6.0
      %v891 = vmin.f32 %v835, 6.0
      %v892 = vmin.f32 %v836, 6.0
      %v893 = vmin.f32 %v837, 6.0
      %v894 = vmin.f32 %v838, 6.0
      %v895 = vmin.f32 %v839, 6.0
      %v896 = vmin.f32 %v840, 6.0
      %v897 = vmin.f32 %v841, 6.0
      %v898 = vmin.f32 %v842, 6.0
      %v899 = vmin.f32 %v843, 6.0
      %v900 = vmin.f32 %v844, 6.0
      %v901 = vmin.f32 %v845, 6.0
      %v902 = vmin.f32 %v846, 6.0
      %v903 = vmin.f32 %v847, 6.0
      %v904 = vmin.f32 %v848, 6.0
      %v905 = vpack.c.bf16 %v850, %v849
      %v906 = vpack.c.bf16 %v852, %v851
      %v907 = vpack.c.bf16 %v854, %v853
      %v908 = vpack.c.bf16 %v856, %v855
      %v909 = vpack.c.bf16 %v858, %v857
      %v910 = vpack.c.bf16 %v860, %v859
      %v911 = vpack.c.bf16 %v862, %v861
      %v912 = vpack.c.bf16 %v864, %v863
      %v913 = vpack.c.bf16 %v866, %v865
      %v914 = vpack.c.bf16 %v868, %v867
      %v915 = vpack.c.bf16 %v870, %v869
      %v916 = vpack.c.bf16 %v872, %v871
      %v917 = vpack.c.bf16 %v874, %v873
      %v918 = vpack.c.bf16 %v876, %v875
      %v919 = vpack.c.bf16 %v878, %v877
      %v920 = vpack.c.bf16 %v880, %v879
      %v921 = vpack.c.bf16 %v882, %v881
      %v922 = vpack.c.bf16 %v884, %v883
      %v923 = vpack.c.bf16 %v886, %v885
      %v924 = vpack.c.bf16 %v888, %v887
      %v925 = vpack.c.bf16 %v890, %v889
      %v926 = vpack.c.bf16 %v892, %v891
      %v927 = vpack.c.bf16 %v894, %v893
      %v928 = vpack.c.bf16 %v896, %v895
      %v929 = vpack.c.bf16 %v898, %v897
      %v930 = vpack.c.bf16 %v900, %v899
      %v931 = vpack.c.bf16 %v902, %v901
      %v932 = vpack.c.bf16 %v904, %v903
      %v961 = vunpack.c.l.b16 %v905
      %v962 = vunpack.c.h.b16 %v905
      %v963 = vunpack.c.l.b16 %v906
      %v964 = vunpack.c.h.b16 %v906
      %v965 = vunpack.c.l.b16 %v907
      %v966 = vunpack.c.h.b16 %v907
      %v967 = vunpack.c.l.b16 %v908
      %v968 = vunpack.c.h.b16 %v908
      %v969 = vunpack.c.l.b16 %v909
      %v970 = vunpack.c.h.b16 %v909
      %v971 = vunpack.c.l.b16 %v910
      %v972 = vunpack.c.h.b16 %v910
      %v973 = vunpack.c.l.b16 %v911
      %v974 = vunpack.c.h.b16 %v911
      %v975 = vunpack.c.l.b16 %v912
      %v976 = vunpack.c.h.b16 %v912
      %v977 = vunpack.c.l.b16 %v913
      %v978 = vunpack.c.h.b16 %v913
      %v979 = vunpack.c.l.b16 %v914
      %v980 = vunpack.c.h.b16 %v914
      %v981 = vunpack.c.l.b16 %v915
      %v982 = vunpack.c.h.b16 %v915
      %v983 = vunpack.c.l.b16 %v916
      %v984 = vunpack.c.h.b16 %v916
      %v985 = vunpack.c.l.b16 %v917
      %v986 = vunpack.c.h.b16 %v917
      %v987 = vunpack.c.l.b16 %v918
      %v988 = vunpack.c.h.b16 %v918
      %v989 = vunpack.c.l.b16 %v919
      %v990 = vunpack.c.h.b16 %v919
      %v991 = vunpack.c.l.b16 %v920
      %v992 = vunpack.c.h.b16 %v920
      %v993 = vunpack.c.l.b16 %v921
      %v994 = vunpack.c.h.b16 %v921
      %v995 = vunpack.c.l.b16 %v922
      %v996 = vunpack.c.h.b16 %v922
      %v997 = vunpack.c.l.b16 %v923
      %v998 = vunpack.c.h.b16 %v923
      %v999 = vunpack.c.l.b16 %v924
      %v1000 = vunpack.c.h.b16 %v924
      %v1001 = vunpack.c.l.b16 %v925
      %v1002 = vunpack.c.h.b16 %v925
      %v1003 = vunpack.c.l.b16 %v926
      %v1004 = vunpack.c.h.b16 %v926
      %v1005 = vunpack.c.l.b16 %v927
      %v1006 = vunpack.c.h.b16 %v927
      %v1007 = vunpack.c.l.b16 %v928
      %v1008 = vunpack.c.h.b16 %v928
      %v1009 = vunpack.c.l.b16 %v929
      %v1010 = vunpack.c.h.b16 %v929
      %v1011 = vunpack.c.l.b16 %v930
      %v1012 = vunpack.c.h.b16 %v930
      %v1013 = vunpack.c.l.b16 %v931
      %v1014 = vunpack.c.h.b16 %v931
      %v1015 = vunpack.c.l.b16 %v932
      %v1016 = vunpack.c.h.b16 %v932
      %v1017 = vpack.c.b16 %v961, %v961
      %v1018 = vpack.c.b16 %v962, %v962
      %v1019 = vpack.c.b16 %v963, %v963
      %v1020 = vpack.c.b16 %v964, %v964
      %v1021 = vpack.c.b16 %v965, %v965
      %v1022 = vpack.c.b16 %v966, %v966
      %v1023 = vpack.c.b16 %v967, %v967
      %v1024 = vpack.c.b16 %v968, %v968
      %v1025 = vpack.c.b16 %v969, %v969
      %v1026 = vpack.c.b16 %v970, %v970
      %v1027 = vpack.c.b16 %v971, %v971
      %v1028 = vpack.c.b16 %v972, %v972
      %v1029 = vpack.c.b16 %v973, %v973
      %v1030 = vpack.c.b16 %v974, %v974
      %v1031 = vpack.c.b16 %v975, %v975
      %v1032 = vpack.c.b16 %v976, %v976
      %v1033 = vpack.c.b16 %v977, %v977
      %v1034 = vpack.c.b16 %v978, %v978
      %v1035 = vpack.c.b16 %v979, %v979
      %v1036 = vpack.c.b16 %v980, %v980
      %v1037 = vpack.c.b16 %v981, %v981
      %v1038 = vpack.c.b16 %v982, %v982
      %v1039 = vpack.c.b16 %v983, %v983
      %v1040 = vpack.c.b16 %v984, %v984
      %v1041 = vpack.c.b16 %v985, %v985
      %v1042 = vpack.c.b16 %v986, %v986
      %v1043 = vpack.c.b16 %v987, %v987
      %v1044 = vpack.c.b16 %v988, %v988
      %v1045 = vpack.c.b16 %v989, %v989
      %v1046 = vpack.c.b16 %v990, %v990
      %v1047 = vpack.c.b16 %v991, %v991
      %v1048 = vpack.c.b16 %v992, %v992
      %v1049 = vpack.c.b16 %v993, %v993
      %v1050 = vpack.c.b16 %v994, %v994
      %v1051 = vpack.c.b16 %v995, %v995
      %v1052 = vpack.c.b16 %v996, %v996
      %v1053 = vpack.c.b16 %v997, %v997
      %v1054 = vpack.c.b16 %v998, %v998
      %v1055 = vpack.c.b16 %v999, %v999
      %v1056 = vpack.c.b16 %v1000, %v1000
      %v1057 = vpack.c.b16 %v1001, %v1001
      %v1058 = vpack.c.b16 %v1002, %v1002
      %v1059 = vpack.c.b16 %v1003, %v1003
      %v1060 = vpack.c.b16 %v1004, %v1004
      %v1061 = vpack.c.b16 %v1005, %v1005
      %v1062 = vpack.c.b16 %v1006, %v1006
      %v1063 = vpack.c.b16 %v1007, %v1007
      %v1064 = vpack.c.b16 %v1008, %v1008
      %v1065 = vpack.c.b16 %v1009, %v1009
      %v1066 = vpack.c.b16 %v1010, %v1010
      %v1067 = vpack.c.b16 %v1011, %v1011
      %v1068 = vpack.c.b16 %v1012, %v1012
      %v1069 = vpack.c.b16 %v1013, %v1013
      %v1070 = vpack.c.b16 %v1014, %v1014
      %v1071 = vpack.c.b16 %v1015, %v1015
      %v1072 = vpack.c.b16 %v1016, %v1016
      %vm1129 = vcmask 257024
      %1130 = vst.msk [vmem:[%s223] sm:$0xf] %vm1129, %v1017
      %1131 = vst.msk [vmem:[%s223 + $0x4] sm:$0xf] %vm1129, %v1018
      %1132 = vst.msk [vmem:[%s223 + $0x8] sm:$0xf] %vm1129, %v1019
      %1133 = vst.msk [vmem:[%s223 + $0xc] sm:$0xf] %vm1129, %v1020
      %1134 = vst.msk [vmem:[%s223 + $0x10] sm:$0xf] %vm1129, %v1021
      %1135 = vst.msk [vmem:[%s223 + $0x14] sm:$0xf] %vm1129, %v1022
      %1136 = vst.msk [vmem:[%s223 + $0x18] sm:$0xf] %vm1129, %v1023
      %1137 = vst.msk [vmem:[%s223 + $0x1c] sm:$0xf] %vm1129, %v1024
      %1138 = vst.msk [vmem:[%s223 + $0x20] sm:$0xf] %vm1129, %v1025
      %1139 = vst.msk [vmem:[%s223 + $0x24] sm:$0xf] %vm1129, %v1026
      %1140 = vst.msk [vmem:[%s223 + $0x28] sm:$0xf] %vm1129, %v1027
      %1141 = vst.msk [vmem:[%s223 + $0x2c] sm:$0xf] %vm1129, %v1028
      %1142 = vst.msk [vmem:[%s223 + $0x30] sm:$0xf] %vm1129, %v1029
      %1143 = vst.msk [vmem:[%s223 + $0x34] sm:$0xf] %vm1129, %v1030
      %1144 = vst.msk [vmem:[%s223 + $0x38] sm:$0xf] %vm1129, %v1031
      %1145 = vst.msk [vmem:[%s223 + $0x3c] sm:$0xf] %vm1129, %v1032
      %1146 = vst.msk [vmem:[%s223 + $0x40] sm:$0xf] %vm1129, %v1033
      %1147 = vst.msk [vmem:[%s223 + $0x44] sm:$0xf] %vm1129, %v1034
      %1148 = vst.msk [vmem:[%s223 + $0x48] sm:$0xf] %vm1129, %v1035
      %1149 = vst.msk [vmem:[%s223 + $0x4c] sm:$0xf] %vm1129, %v1036
      %1150 = vst.msk [vmem:[%s223 + $0x50] sm:$0xf] %vm1129, %v1037
      %1151 = vst.msk [vmem:[%s223 + $0x54] sm:$0xf] %vm1129, %v1038
      %1152 = vst.msk [vmem:[%s223 + $0x58] sm:$0xf] %vm1129, %v1039
      %1153 = vst.msk [vmem:[%s223 + $0x5c] sm:$0xf] %vm1129, %v1040
      %1154 = vst.msk [vmem:[%s223 + $0x60] sm:$0xf] %vm1129, %v1041
      %1155 = vst.msk [vmem:[%s223 + $0x64] sm:$0xf] %vm1129, %v1042
      %1156 = vst.msk [vmem:[%s223 + $0x68] sm:$0xf] %vm1129, %v1043
      %1157 = vst.msk [vmem:[%s223 + $0x6c] sm:$0xf] %vm1129, %v1044
      %1158 = vst.msk [vmem:[%s223 + $0x70] sm:$0xf] %vm1129, %v1045
      %1159 = vst.msk [vmem:[%s223 + $0x74] sm:$0xf] %vm1129, %v1046
      %1160 = vst.msk [vmem:[%s223 + $0x78] sm:$0xf] %vm1129, %v1047
      %1161 = vst.msk [vmem:[%s223 + $0x7c] sm:$0xf] %vm1129, %v1048
      %1162 = vst.msk [vmem:[%s223 + $0x80] sm:$0xf] %vm1129, %v1049
      %1163 = vst.msk [vmem:[%s223 + $0x84] sm:$0xf] %vm1129, %v1050
      %1164 = vst.msk [vmem:[%s223 + $0x88] sm:$0xf] %vm1129, %v1051
      %1165 = vst.msk [vmem:[%s223 + $0x8c] sm:$0xf] %vm1129, %v1052
      %1166 = vst.msk [vmem:[%s223 + $0x90] sm:$0xf] %vm1129, %v1053
      %1167 = vst.msk [vmem:[%s223 + $0x94] sm:$0xf] %vm1129, %v1054
      %1168 = vst.msk [vmem:[%s223 + $0x98] sm:$0xf] %vm1129, %v1055
      %1169 = vst.msk [vmem:[%s223 + $0x9c] sm:$0xf] %vm1129, %v1056
      %1170 = vst.msk [vmem:[%s223 + $0xa0] sm:$0xf] %vm1129, %v1057
      %1171 = vst.msk [vmem:[%s223 + $0xa4] sm:$0xf] %vm1129, %v1058
      %1172 = vst.msk [vmem:[%s223 + $0xa8] sm:$0xf] %vm1129, %v1059
      %1173 = vst.msk [vmem:[%s223 + $0xac] sm:$0xf] %vm1129, %v1060
      %1174 = vst.msk [vmem:[%s223 + $0xb0] sm:$0xf] %vm1129, %v1061
      %1175 = vst.msk [vmem:[%s223 + $0xb4] sm:$0xf] %vm1129, %v1062
      %1176 = vst.msk [vmem:[%s223 + $0xb8] sm:$0xf] %vm1129, %v1063
      %1177 = vst.msk [vmem:[%s223 + $0xbc] sm:$0xf] %vm1129, %v1064
      %1178 = vst.msk [vmem:[%s223 + $0xc0] sm:$0xf] %vm1129, %v1065
      %1179 = vst.msk [vmem:[%s223 + $0xc4] sm:$0xf] %vm1129, %v1066
      %1180 = vst.msk [vmem:[%s223 + $0xc8] sm:$0xf] %vm1129, %v1067
      %1181 = vst.msk [vmem:[%s223 + $0xcc] sm:$0xf] %vm1129, %v1068
      %1182 = vst.msk [vmem:[%s223 + $0xd0] sm:$0xf] %vm1129, %v1069
      %1183 = vst.msk [vmem:[%s223 + $0xd4] sm:$0xf] %vm1129, %v1070
      %1184 = vst.msk [vmem:[%s223 + $0xd8] sm:$0xf] %vm1129, %v1071
      %1185 = vst.msk [vmem:[%s223 + $0xdc] sm:$0xf] %vm1129, %v1072
      %s1186 = smul.u32 56, %s18
      %p1187 = scmp.lt.s32.totalorder %s1186, 1567
      %s1188 = scalar_select %p1187, %s1186, 1567
      %p1189 = scmp.lt.s32.totalorder %s19, 0
      %s1190 = scalar_select %p1189, %s19, 0
      %s1191 = sadd.s32 %s1190, %s1188
      %s1192 = smul.addr %s1191, 4
      %s1193 = scalar_lea.vmem %s3, %s1192
      // Predicated region
      $region33: #{tpu_custom_call.1} parent=31 // pred_check
        %p1194 = pneg %p124
      $region34: #{tpu_custom_call.1} parent=31 // pred_check_branch
        %1196 = sbr.rel (%p1194) target = $region36
      $region35: #{tpu_custom_call.1} parent=31 // pred_region
        %s1197 = smul.u32 56, %s18
      $region36: #{tpu_custom_call.1} parent=31 // pred_fallthru
        _
    $region32: #{tpu_custom_call.1} parent=5 // pred_fallthru
      _
    %p1198 = scmp.le.s32.totalorder 2, %s9
    // Predicated region
    $region37: #{tpu_custom_call.1} parent=5 // pred_check
      %p1199 = pneg %p1198
    $region38: #{tpu_custom_call.1} parent=5 // pred_check_branch
      %1201 = sbr.rel (%p1199) target = $region40
    $region39: #{tpu_custom_call.1} parent=5 // pred_region
      %s1202 = ssub.s32 %s9, 2
      // Predicated region
      $region41: #{tpu_custom_call.1} parent=39 // pred_check
        %p1203 = pneg %p130
      $region42: #{tpu_custom_call.1} parent=39 // pred_check_branch
        %1205 = sbr.rel (%p1203) target = $region44
      $region43: #{tpu_custom_call.1} parent=39 // pred_region
        %s1206 = smul.u32 56, %s20
        %p1207 = scmp.lt.s32.totalorder %s1206, 1567
        %s1208 = scalar_select %p1207, %s1206, 1567
        %p1209 = scmp.lt.s32.totalorder %s21, 0
        %s1210 = scalar_select %p1209, %s21, 0
        %s1211 = sadd.s32 %s1210, %s1208
        %s1212 = smul.addr %s1211, 4
        %s1213 = scalar_lea.vmem %s3, %s1212
      $region44: #{tpu_custom_call.1} parent=39 // pred_fallthru
        _
    $region40: #{tpu_custom_call.1} parent=5 // pred_fallthru
      _
  $region6: #{tpu_custom_call.1} parent=0 // loop_footer
    %s13 = sadd.s32 1, %s9
  $region7: #{tpu_custom_call.1} parent=0 // loop_footer_branch
    %8 = sbr.rel target = $region3
  $region8: #{tpu_custom_call.1} parent=0 // loop_exit
    _

</llo_original>
